<compile_context>
chip_gen: v7x
topology: tpu7x:2x2x1
jax: 0.10.0
libtpu: 0.0.40
codegen_flags: <defaults>
</compile_context>

<pallas_src>
import functools
import math

import jax
import jax.numpy as jnp
from jax.experimental import pallas as pl
from jax.experimental.pallas import tpu as pltpu


# ---------------------------------------------------------------------------
# Fused kernel: one batch element per grid step, all heads inside the step.
# ---------------------------------------------------------------------------
def _fused_lora_mha_kernel(q_ref, k_ref, v_ref, w_ref, b_ref, up_ref,
                           down_ref, wot_ref, bo_ref, out_ref, attnw_ref, *,
                           num_heads, head_dim, scale):
    H, Dh = num_heads, head_dim
    E = H * Dh

    xq = q_ref[0]          # (L, E)
    xk = k_ref[0]          # (S, E)
    xv = v_ref[0]          # (S, E)

    w = w_ref[...]         # (3E, E)  combined in_proj weight (rows: q|k|v)
    up = up_ref[...]       # (3E, R)  LoRA up, pre-scaled by alpha on host
    down = down_ref[...]   # (R, E)   LoRA down (shared across q/k/v)
    b3 = b_ref[...]        # (3, E)   in_proj bias rows: q|k|v
    wot = wot_ref[...]     # (E, E)   out_proj_weight.T (pre-transposed)

    def dot_t(x, m):
        # x @ m.T without an explicit in-kernel transpose (trans-B matmul).
        return jax.lax.dot_general(
            x, m, (((1,), (1,)), ((), ())),
            preferred_element_type=jnp.float32)

    # Shared LoRA "down" projections (rank path; W_adj never materialized).
    xq_d = dot_t(xq, down)  # (L, R)
    xk_d = dot_t(xk, down)  # (S, R)
    xv_d = dot_t(xv, down)  # (S, R)

    # Full-width LoRA-adjusted projections (sublane-aligned row slices of the
    # grouped weights; one large matmul per projection instead of H small).
    # q is pre-scaled by 1/sqrt(Dh) (PyTorch scales q after bias addition).
    q_all = (dot_t(xq, w[:E, :]) + dot_t(xq_d, up[:E, :])
             + b3[0:1, :]) * scale                                  # (L, E)
    k_all = (dot_t(xk, w[E:2 * E, :]) + dot_t(xk_d, up[E:2 * E, :])
             + b3[1:2, :])                                          # (S, E)
    v_all = (dot_t(xv, w[2 * E:, :]) + dot_t(xv_d, up[2 * E:, :])
             + b3[2:3, :])                                          # (S, E)

    # Per-head attention (static unroll; heads are static lane slices).
    attnw_acc = None
    ctx_heads = []
    for h in range(H):
        c0 = h * Dh
        q_h = q_all[:, c0:c0 + Dh]                                  # (L, Dh)
        k_h = k_all[:, c0:c0 + Dh]                                  # (S, Dh)
        v_h = v_all[:, c0:c0 + Dh]                                  # (S, Dh)

        s = dot_t(q_h, k_h)                                         # (L, S)
        s = s - jnp.max(s, axis=-1, keepdims=True)
        p = jnp.exp(s)
        p = p * pl.reciprocal(jnp.sum(p, axis=-1, keepdims=True), approx=True)

        attnw_acc = p if attnw_acc is None else attnw_acc + p
        ctx_heads.append(jnp.dot(p, v_h, preferred_element_type=jnp.float32))

    # Single out-projection matmul on the concatenated context.
    ctx = jnp.concatenate(ctx_heads, axis=-1)                       # (L, E)
    out_ref[0] = (jnp.dot(ctx, wot, preferred_element_type=jnp.float32)
                  + bo_ref[...])                                    # (L, E)
    attnw_ref[0] = attnw_acc * (1.0 / H)                            # (L, S)


# ---------------------------------------------------------------------------
# Wrapper: single pallas_call for the whole LoRA-MHA forward.
# ---------------------------------------------------------------------------
def lora_mha_forward(query, key, value, params, *, num_heads, alpha):
    # query: (L, N, E), key/value: (S, N, E)   (PyTorch MHA default layout)
    L, N, E = query.shape
    S = key.shape[0]
    H = num_heads
    Dh = E // H
    R = params["rank_down"].shape[0]
    scale = 1.0 / math.sqrt(Dh)

    # One tiny transpose in/out to batch-first so per-batch blocks are
    # rectangular; everything else stays inside the kernel (VMEM resident).
    qb = jnp.transpose(query, (1, 0, 2))    # (N, L, E)
    kb = jnp.transpose(key, (1, 0, 2))      # (N, S, E)
    vb = jnp.transpose(value, (1, 0, 2))    # (N, S, E)

    b3 = params["in_proj_bias"].reshape(3, E)            # rows: q|k|v
    up_scaled = alpha * params["rank_up"]                # fold alpha on host
    wot = params["out_proj_weight"].T                    # (E, E) pre-transposed
    bo2 = params["out_proj_bias"].reshape(1, E)

    kernel = functools.partial(_fused_lora_mha_kernel, num_heads=H,
                               head_dim=Dh, scale=scale)

    out_b, attn_w = pl.pallas_call(
        kernel,
        out_shape=(jax.ShapeDtypeStruct((N, L, E), jnp.float32),
                   jax.ShapeDtypeStruct((N, L, S), jnp.float32)),
        grid=(N,),
        in_specs=[
            pl.BlockSpec((1, L, E), lambda n: (n, 0, 0)),     # query
            pl.BlockSpec((1, S, E), lambda n: (n, 0, 0)),     # key
            pl.BlockSpec((1, S, E), lambda n: (n, 0, 0)),     # value
            pl.BlockSpec((3 * E, E), lambda n: (0, 0)),       # in_proj_weight
            pl.BlockSpec((3, E), lambda n: (0, 0)),           # in_proj_bias
            pl.BlockSpec((3 * E, R), lambda n: (0, 0)),       # alpha*rank_up
            pl.BlockSpec((R, E), lambda n: (0, 0)),           # rank_down
            pl.BlockSpec((E, E), lambda n: (0, 0)),           # out_proj_w.T
            pl.BlockSpec((1, E), lambda n: (0, 0)),           # out_proj_bias
        ],
        out_specs=(
            pl.BlockSpec((1, L, E), lambda n: (n, 0, 0)),
            pl.BlockSpec((1, L, S), lambda n: (n, 0, 0)),
        ),
        compiler_params=pltpu.CompilerParams(
            dimension_semantics=("parallel",)),
    )(qb, kb, vb, params["in_proj_weight"], b3,
      up_scaled, params["rank_down"], wot, bo2)

    out = jnp.transpose(out_b, (1, 0, 2))   # back to (L, N, E)
    return out, attn_w


# ---------------------------------------------------------------------------
# Pure-JAX reference (for correctness check)
# ---------------------------------------------------------------------------
def reference_forward(query, key, value, params, *, num_heads, alpha):
    L, N, E = query.shape
    S = key.shape[0]
    H = num_heads
    Dh = E // H
    w_adj = params["in_proj_weight"] + alpha * (
        params["rank_up"] @ params["rank_down"])
    b = params["in_proj_bias"]
    wq, wk, wv = w_adj[:E], w_adj[E:2 * E], w_adj[2 * E:]
    bq, bk, bv = b[:E], b[E:2 * E], b[2 * E:]
    qb = jnp.transpose(query, (1, 0, 2))
    kb = jnp.transpose(key, (1, 0, 2))
    vb = jnp.transpose(value, (1, 0, 2))
    q = qb @ wq.T + bq
    k = kb @ wk.T + bk
    v = vb @ wv.T + bv
    qh = q.reshape(N, L, H, Dh).transpose(0, 2, 1, 3)
    kh = k.reshape(N, S, H, Dh).transpose(0, 2, 1, 3)
    vh = v.reshape(N, S, H, Dh).transpose(0, 2, 1, 3)
    s = jnp.einsum("nhld,nhsd->nhls", qh, kh) / math.sqrt(Dh)
    p = jax.nn.softmax(s, axis=-1)
    ctx = jnp.einsum("nhls,nhsd->nhld", p, vh)
    ctx = ctx.transpose(0, 2, 1, 3).reshape(N, L, E)
    out = ctx @ params["out_proj_weight"].T + params["out_proj_bias"]
    return out.transpose(1, 0, 2), p.mean(axis=1)


# ---------------------------------------------------------------------------
if __name__ == "__main__":
    # Small shapes consistent with the module: embed=32, heads=4, seq=8,
    # batch=2, rank=16, alpha=1.
    E, H, L, S, N = 32, 4, 8, 8, 2
    RANK, ALPHA = 16, 1.0

    key0 = jax.random.PRNGKey(0)
    ks = jax.random.split(key0, 8)

    # Deterministic parameter init (shapes per LoRALayer_vit.__init__ with an
    # nn.MultiheadAttention original_layer).  The module zero-inits rank_up;
    # we use small random values instead so the LoRA matmul path is actually
    # exercised (forward math is identical).
    bound_down = 1.0 / math.sqrt(E)  # kaiming_uniform(a=sqrt(5)) bound
    params = {
        "in_proj_weight": jax.random.normal(ks[0], (3 * E, E), jnp.float32) * 0.1,
        "in_proj_bias": jax.random.normal(ks[1], (3 * E,), jnp.float32) * 0.1,
        "out_proj_weight": jax.random.normal(ks[2], (E, E), jnp.float32) * 0.1,
        "out_proj_bias": jax.random.normal(ks[3], (E,), jnp.float32) * 0.1,
        "rank_down": jax.random.uniform(
            ks[4], (RANK, E), jnp.float32, -bound_down, bound_down),
        "rank_up": jax.random.normal(ks[5], (E * 3, RANK), jnp.float32) * 0.05,
    }

    query = jax.random.normal(ks[6], (L, N, E), jnp.float32)
    kv_key = jax.random.split(ks[7], 2)
    key_in = jax.random.normal(kv_key[0], (S, N, E), jnp.float32)
    value_in = jax.random.normal(kv_key[1], (S, N, E), jnp.float32)

    out, attn_w = lora_mha_forward(query, key_in, value_in, params,
                                   num_heads=H, alpha=ALPHA)
    out = jax.block_until_ready(out)
    attn_w = jax.block_until_ready(attn_w)

    ref_out, ref_w = reference_forward(query, key_in, value_in, params,
                                       num_heads=H, alpha=ALPHA)
    assert out.shape == (L, N, E)
    assert attn_w.shape == (N, L, S)
    # Tolerance slightly loosened vs 1e-4 because the kernel uses the EUP
    # approximate reciprocal (pl.reciprocal(approx=True)) in the softmax.
    assert jnp.allclose(out, ref_out, rtol=5e-3, atol=5e-3)
    assert jnp.allclose(attn_w, ref_w, rtol=5e-3, atol=5e-3)

    print("KERNEL_OK")
</pallas_src>

<mosaic_0001>
module attributes {stable_mosaic.version = 11 : i64} {
  func.func @_fused_lora_mha_kernel(%arg0: i32, %arg1: memref<1x8x32xf32, #tpu.memory_space<vmem>>, %arg2: memref<1x8x32xf32, #tpu.memory_space<vmem>>, %arg3: memref<1x8x32xf32, #tpu.memory_space<vmem>>, %arg4: memref<96x32xf32, #tpu.memory_space<vmem>>, %arg5: memref<3x32xf32, #tpu.memory_space<vmem>>, %arg6: memref<96x16xf32, #tpu.memory_space<vmem>>, %arg7: memref<16x32xf32, #tpu.memory_space<vmem>>, %arg8: memref<32x32xf32, #tpu.memory_space<vmem>>, %arg9: memref<1x32xf32, #tpu.memory_space<vmem>>, %arg10: memref<1x8x32xf32, #tpu.memory_space<vmem>>, %arg11: memref<1x8x8xf32, #tpu.memory_space<vmem>>) attributes {dimension_semantics = [#tpu.dimension_semantics<parallel>], iteration_bounds = array<i64: 2>, scalar_prefetch = 0 : i64, scratch_operands = 0 : i64, tpu.core_type = #tpu.core_type<tc>, window_params = [{transform_indices = @transform_0, window_bounds = array<i64: 1, 8, 32>}, {transform_indices = @transform_1, window_bounds = array<i64: 1, 8, 32>}, {transform_indices = @transform_2, window_bounds = array<i64: 1, 8, 32>}, {pipeline_mode = #tpu.pipeline_mode<synchronous>, transform_indices = @transform_3, window_bounds = array<i64: 96, 32>}, {pipeline_mode = #tpu.pipeline_mode<synchronous>, transform_indices = @transform_4, window_bounds = array<i64: 3, 32>}, {pipeline_mode = #tpu.pipeline_mode<synchronous>, transform_indices = @transform_5, window_bounds = array<i64: 96, 16>}, {pipeline_mode = #tpu.pipeline_mode<synchronous>, transform_indices = @transform_6, window_bounds = array<i64: 16, 32>}, {pipeline_mode = #tpu.pipeline_mode<synchronous>, transform_indices = @transform_7, window_bounds = array<i64: 32, 32>}, {pipeline_mode = #tpu.pipeline_mode<synchronous>, transform_indices = @transform_8, window_bounds = array<i64: 1, 32>}, {transform_indices = @transform_9, window_bounds = array<i64: 1, 8, 32>}, {transform_indices = @transform_10, window_bounds = array<i64: 1, 8, 8>}]} {
    %c0 = arith.constant 0 : index
    %c0_0 = arith.constant 0 : index
    %c0_1 = arith.constant 0 : index
    %0 = vector.load %arg1[%c0, %c0_0, %c0_1] : memref<1x8x32xf32, #tpu.memory_space<vmem>>, vector<1x8x32xf32>
    %1 = vector.shape_cast %0 : vector<1x8x32xf32> to vector<8x32xf32>
    %c0_2 = arith.constant 0 : index
    %c0_3 = arith.constant 0 : index
    %c0_4 = arith.constant 0 : index
    %2 = vector.load %arg2[%c0_2, %c0_3, %c0_4] : memref<1x8x32xf32, #tpu.memory_space<vmem>>, vector<1x8x32xf32>
    %3 = vector.shape_cast %2 : vector<1x8x32xf32> to vector<8x32xf32>
    %c0_5 = arith.constant 0 : index
    %c0_6 = arith.constant 0 : index
    %c0_7 = arith.constant 0 : index
    %4 = vector.load %arg3[%c0_5, %c0_6, %c0_7] : memref<1x8x32xf32, #tpu.memory_space<vmem>>, vector<1x8x32xf32>
    %5 = vector.shape_cast %4 : vector<1x8x32xf32> to vector<8x32xf32>
    %c0_8 = arith.constant 0 : index
    %c0_9 = arith.constant 0 : index
    %6 = vector.load %arg4[%c0_8, %c0_9] : memref<96x32xf32, #tpu.memory_space<vmem>>, vector<96x32xf32>
    %c0_10 = arith.constant 0 : index
    %c0_11 = arith.constant 0 : index
    %7 = vector.load %arg6[%c0_10, %c0_11] : memref<96x16xf32, #tpu.memory_space<vmem>>, vector<96x16xf32>
    %c0_12 = arith.constant 0 : index
    %c0_13 = arith.constant 0 : index
    %8 = vector.load %arg7[%c0_12, %c0_13] : memref<16x32xf32, #tpu.memory_space<vmem>>, vector<16x32xf32>
    %c0_14 = arith.constant 0 : index
    %c0_15 = arith.constant 0 : index
    %9 = vector.load %arg5[%c0_14, %c0_15] : memref<3x32xf32, #tpu.memory_space<vmem>>, vector<3x32xf32>
    %c0_16 = arith.constant 0 : index
    %c0_17 = arith.constant 0 : index
    %10 = vector.load %arg8[%c0_16, %c0_17] : memref<32x32xf32, #tpu.memory_space<vmem>>, vector<32x32xf32>
    %cst = arith.constant dense<0.000000e+00> : vector<8x16xf32>
    %11 = tpu.matmul %1, %8, %cst {dimension_numbers = #tpu.dot_dimension_numbers<[1], [1], [0], [0], [0, 0, 1, 0], [], []>} : vector<8x32xf32>, vector<16x32xf32>, vector<8x16xf32> -> vector<8x16xf32>
    %cst_18 = arith.constant dense<0.000000e+00> : vector<8x16xf32>
    %12 = tpu.matmul %3, %8, %cst_18 {dimension_numbers = #tpu.dot_dimension_numbers<[1], [1], [0], [0], [0, 0, 1, 0], [], []>} : vector<8x32xf32>, vector<16x32xf32>, vector<8x16xf32> -> vector<8x16xf32>
    %cst_19 = arith.constant dense<0.000000e+00> : vector<8x16xf32>
    %13 = tpu.matmul %5, %8, %cst_19 {dimension_numbers = #tpu.dot_dimension_numbers<[1], [1], [0], [0], [0, 0, 1, 0], [], []>} : vector<8x32xf32>, vector<16x32xf32>, vector<8x16xf32> -> vector<8x16xf32>
    %14 = vector.extract_strided_slice %6 {offsets = [0, 0], sizes = [32, 32], strides = [1, 1]} : vector<96x32xf32> to vector<32x32xf32>
    %cst_20 = arith.constant dense<0.000000e+00> : vector<8x32xf32>
    %15 = tpu.matmul %1, %14, %cst_20 {dimension_numbers = #tpu.dot_dimension_numbers<[1], [1], [0], [0], [0, 0, 1, 0], [], []>} : vector<8x32xf32>, vector<32x32xf32>, vector<8x32xf32> -> vector<8x32xf32>
    %16 = vector.extract_strided_slice %7 {offsets = [0, 0], sizes = [32, 16], strides = [1, 1]} : vector<96x16xf32> to vector<32x16xf32>
    %cst_21 = arith.constant dense<0.000000e+00> : vector<8x32xf32>
    %17 = tpu.matmul %11, %16, %cst_21 {dimension_numbers = #tpu.dot_dimension_numbers<[1], [1], [0], [0], [0, 0, 1, 0], [], []>} : vector<8x16xf32>, vector<32x16xf32>, vector<8x32xf32> -> vector<8x32xf32>
    %18 = arith.addf %15, %17 : vector<8x32xf32>
    %19 = vector.extract_strided_slice %9 {offsets = [0, 0], sizes = [1, 32], strides = [1, 1]} : vector<3x32xf32> to vector<1x32xf32>
    %20 = vector.broadcast %19 : vector<1x32xf32> to vector<8x32xf32>
    %21 = arith.addf %18, %20 : vector<8x32xf32>
    %cst_22 = arith.constant 0.353553385 : f32
    %22 = vector.broadcast %cst_22 : f32 to vector<8x32xf32>
    %23 = arith.mulf %21, %22 : vector<8x32xf32>
    %24 = vector.extract_strided_slice %6 {offsets = [32, 0], sizes = [32, 32], strides = [1, 1]} : vector<96x32xf32> to vector<32x32xf32>
    %cst_23 = arith.constant dense<0.000000e+00> : vector<8x32xf32>
    %25 = tpu.matmul %3, %24, %cst_23 {dimension_numbers = #tpu.dot_dimension_numbers<[1], [1], [0], [0], [0, 0, 1, 0], [], []>} : vector<8x32xf32>, vector<32x32xf32>, vector<8x32xf32> -> vector<8x32xf32>
    %26 = vector.extract_strided_slice %7 {offsets = [32, 0], sizes = [32, 16], strides = [1, 1]} : vector<96x16xf32> to vector<32x16xf32>
    %cst_24 = arith.constant dense<0.000000e+00> : vector<8x32xf32>
    %27 = tpu.matmul %12, %26, %cst_24 {dimension_numbers = #tpu.dot_dimension_numbers<[1], [1], [0], [0], [0, 0, 1, 0], [], []>} : vector<8x16xf32>, vector<32x16xf32>, vector<8x32xf32> -> vector<8x32xf32>
    %28 = arith.addf %25, %27 : vector<8x32xf32>
    %29 = vector.extract_strided_slice %9 {offsets = [1, 0], sizes = [1, 32], strides = [1, 1]} : vector<3x32xf32> to vector<1x32xf32>
    %30 = vector.broadcast %29 : vector<1x32xf32> to vector<8x32xf32>
    %31 = arith.addf %28, %30 : vector<8x32xf32>
    %32 = vector.extract_strided_slice %6 {offsets = [64, 0], sizes = [32, 32], strides = [1, 1]} : vector<96x32xf32> to vector<32x32xf32>
    %cst_25 = arith.constant dense<0.000000e+00> : vector<8x32xf32>
    %33 = tpu.matmul %5, %32, %cst_25 {dimension_numbers = #tpu.dot_dimension_numbers<[1], [1], [0], [0], [0, 0, 1, 0], [], []>} : vector<8x32xf32>, vector<32x32xf32>, vector<8x32xf32> -> vector<8x32xf32>
    %34 = vector.extract_strided_slice %7 {offsets = [64, 0], sizes = [32, 16], strides = [1, 1]} : vector<96x16xf32> to vector<32x16xf32>
    %cst_26 = arith.constant dense<0.000000e+00> : vector<8x32xf32>
    %35 = tpu.matmul %13, %34, %cst_26 {dimension_numbers = #tpu.dot_dimension_numbers<[1], [1], [0], [0], [0, 0, 1, 0], [], []>} : vector<8x16xf32>, vector<32x16xf32>, vector<8x32xf32> -> vector<8x32xf32>
    %36 = arith.addf %33, %35 : vector<8x32xf32>
    %37 = vector.extract_strided_slice %9 {offsets = [2, 0], sizes = [1, 32], strides = [1, 1]} : vector<3x32xf32> to vector<1x32xf32>
    %38 = vector.broadcast %37 : vector<1x32xf32> to vector<8x32xf32>
    %39 = arith.addf %36, %38 : vector<8x32xf32>
    %40 = vector.extract_strided_slice %23 {offsets = [0, 0], sizes = [8, 8], strides = [1, 1]} : vector<8x32xf32> to vector<8x8xf32>
    %41 = vector.extract_strided_slice %31 {offsets = [0, 0], sizes = [8, 8], strides = [1, 1]} : vector<8x32xf32> to vector<8x8xf32>
    %42 = vector.extract_strided_slice %39 {offsets = [0, 0], sizes = [8, 8], strides = [1, 1]} : vector<8x32xf32> to vector<8x8xf32>
    %cst_27 = arith.constant dense<0.000000e+00> : vector<8x8xf32>
    %43 = tpu.matmul %40, %41, %cst_27 {dimension_numbers = #tpu.dot_dimension_numbers<[1], [1], [0], [0], [0, 0, 1, 0], [], []>} : vector<8x8xf32>, vector<8x8xf32>, vector<8x8xf32> -> vector<8x8xf32>
    %cst_28 = arith.constant dense<0xFF800000> : vector<8xf32>
    %44 = vector.multi_reduction <maximumf>, %43, %cst_28 [1] : vector<8x8xf32> to vector<8xf32>
    %45 = vector.shape_cast %44 : vector<8xf32> to vector<8x1xf32>
    %46 = vector.broadcast %45 : vector<8x1xf32> to vector<8x8xf32>
    %47 = arith.subf %43, %46 : vector<8x8xf32>
    %48 = math.exp %47 : vector<8x8xf32>
    %cst_29 = arith.constant dense<0.000000e+00> : vector<8xf32>
    %49 = vector.multi_reduction <add>, %48, %cst_29 [1] : vector<8x8xf32> to vector<8xf32>
    %50 = vector.shape_cast %49 : vector<8xf32> to vector<8x1xf32>
    %51 = tpu.reciprocal %50 {approx = true} : vector<8x1xf32> -> vector<8x1xf32>
    %52 = vector.broadcast %51 : vector<8x1xf32> to vector<8x8xf32>
    %53 = arith.mulf %48, %52 : vector<8x8xf32>
    %cst_30 = arith.constant dense<0.000000e+00> : vector<8x8xf32>
    %54 = tpu.matmul %53, %42, %cst_30 {dimension_numbers = #tpu.dot_dimension_numbers<[1], [0], [0], [1], [0, 0, 1, 1], [], []>} : vector<8x8xf32>, vector<8x8xf32>, vector<8x8xf32> -> vector<8x8xf32>
    %55 = vector.extract_strided_slice %23 {offsets = [0, 8], sizes = [8, 8], strides = [1, 1]} : vector<8x32xf32> to vector<8x8xf32>
    %56 = vector.extract_strided_slice %31 {offsets = [0, 8], sizes = [8, 8], strides = [1, 1]} : vector<8x32xf32> to vector<8x8xf32>
    %57 = vector.extract_strided_slice %39 {offsets = [0, 8], sizes = [8, 8], strides = [1, 1]} : vector<8x32xf32> to vector<8x8xf32>
    %cst_31 = arith.constant dense<0.000000e+00> : vector<8x8xf32>
    %58 = tpu.matmul %55, %56, %cst_31 {dimension_numbers = #tpu.dot_dimension_numbers<[1], [1], [0], [0], [0, 0, 1, 0], [], []>} : vector<8x8xf32>, vector<8x8xf32>, vector<8x8xf32> -> vector<8x8xf32>
    %cst_32 = arith.constant dense<0xFF800000> : vector<8xf32>
    %59 = vector.multi_reduction <maximumf>, %58, %cst_32 [1] : vector<8x8xf32> to vector<8xf32>
    %60 = vector.shape_cast %59 : vector<8xf32> to vector<8x1xf32>
    %61 = vector.broadcast %60 : vector<8x1xf32> to vector<8x8xf32>
    %62 = arith.subf %58, %61 : vector<8x8xf32>
    %63 = math.exp %62 : vector<8x8xf32>
    %cst_33 = arith.constant dense<0.000000e+00> : vector<8xf32>
    %64 = vector.multi_reduction <add>, %63, %cst_33 [1] : vector<8x8xf32> to vector<8xf32>
    %65 = vector.shape_cast %64 : vector<8xf32> to vector<8x1xf32>
    %66 = tpu.reciprocal %65 {approx = true} : vector<8x1xf32> -> vector<8x1xf32>
    %67 = vector.broadcast %66 : vector<8x1xf32> to vector<8x8xf32>
    %68 = arith.mulf %63, %67 : vector<8x8xf32>
    %69 = arith.addf %53, %68 : vector<8x8xf32>
    %cst_34 = arith.constant dense<0.000000e+00> : vector<8x8xf32>
    %70 = tpu.matmul %68, %57, %cst_34 {dimension_numbers = #tpu.dot_dimension_numbers<[1], [0], [0], [1], [0, 0, 1, 1], [], []>} : vector<8x8xf32>, vector<8x8xf32>, vector<8x8xf32> -> vector<8x8xf32>
    %71 = vector.extract_strided_slice %23 {offsets = [0, 16], sizes = [8, 8], strides = [1, 1]} : vector<8x32xf32> to vector<8x8xf32>
    %72 = vector.extract_strided_slice %31 {offsets = [0, 16], sizes = [8, 8], strides = [1, 1]} : vector<8x32xf32> to vector<8x8xf32>
    %73 = vector.extract_strided_slice %39 {offsets = [0, 16], sizes = [8, 8], strides = [1, 1]} : vector<8x32xf32> to vector<8x8xf32>
    %cst_35 = arith.constant dense<0.000000e+00> : vector<8x8xf32>
    %74 = tpu.matmul %71, %72, %cst_35 {dimension_numbers = #tpu.dot_dimension_numbers<[1], [1], [0], [0], [0, 0, 1, 0], [], []>} : vector<8x8xf32>, vector<8x8xf32>, vector<8x8xf32> -> vector<8x8xf32>
    %cst_36 = arith.constant dense<0xFF800000> : vector<8xf32>
    %75 = vector.multi_reduction <maximumf>, %74, %cst_36 [1] : vector<8x8xf32> to vector<8xf32>
    %76 = vector.shape_cast %75 : vector<8xf32> to vector<8x1xf32>
    %77 = vector.broadcast %76 : vector<8x1xf32> to vector<8x8xf32>
    %78 = arith.subf %74, %77 : vector<8x8xf32>
    %79 = math.exp %78 : vector<8x8xf32>
    %cst_37 = arith.constant dense<0.000000e+00> : vector<8xf32>
    %80 = vector.multi_reduction <add>, %79, %cst_37 [1] : vector<8x8xf32> to vector<8xf32>
    %81 = vector.shape_cast %80 : vector<8xf32> to vector<8x1xf32>
    %82 = tpu.reciprocal %81 {approx = true} : vector<8x1xf32> -> vector<8x1xf32>
    %83 = vector.broadcast %82 : vector<8x1xf32> to vector<8x8xf32>
    %84 = arith.mulf %79, %83 : vector<8x8xf32>
    %85 = arith.addf %69, %84 : vector<8x8xf32>
    %cst_38 = arith.constant dense<0.000000e+00> : vector<8x8xf32>
    %86 = tpu.matmul %84, %73, %cst_38 {dimension_numbers = #tpu.dot_dimension_numbers<[1], [0], [0], [1], [0, 0, 1, 1], [], []>} : vector<8x8xf32>, vector<8x8xf32>, vector<8x8xf32> -> vector<8x8xf32>
    %87 = vector.extract_strided_slice %23 {offsets = [0, 24], sizes = [8, 8], strides = [1, 1]} : vector<8x32xf32> to vector<8x8xf32>
    %88 = vector.extract_strided_slice %31 {offsets = [0, 24], sizes = [8, 8], strides = [1, 1]} : vector<8x32xf32> to vector<8x8xf32>
    %89 = vector.extract_strided_slice %39 {offsets = [0, 24], sizes = [8, 8], strides = [1, 1]} : vector<8x32xf32> to vector<8x8xf32>
    %cst_39 = arith.constant dense<0.000000e+00> : vector<8x8xf32>
    %90 = tpu.matmul %87, %88, %cst_39 {dimension_numbers = #tpu.dot_dimension_numbers<[1], [1], [0], [0], [0, 0, 1, 0], [], []>} : vector<8x8xf32>, vector<8x8xf32>, vector<8x8xf32> -> vector<8x8xf32>
    %cst_40 = arith.constant dense<0xFF800000> : vector<8xf32>
    %91 = vector.multi_reduction <maximumf>, %90, %cst_40 [1] : vector<8x8xf32> to vector<8xf32>
    %92 = vector.shape_cast %91 : vector<8xf32> to vector<8x1xf32>
    %93 = vector.broadcast %92 : vector<8x1xf32> to vector<8x8xf32>
    %94 = arith.subf %90, %93 : vector<8x8xf32>
    %95 = math.exp %94 : vector<8x8xf32>
    %cst_41 = arith.constant dense<0.000000e+00> : vector<8xf32>
    %96 = vector.multi_reduction <add>, %95, %cst_41 [1] : vector<8x8xf32> to vector<8xf32>
    %97 = vector.shape_cast %96 : vector<8xf32> to vector<8x1xf32>
    %98 = tpu.reciprocal %97 {approx = true} : vector<8x1xf32> -> vector<8x1xf32>
    %99 = vector.broadcast %98 : vector<8x1xf32> to vector<8x8xf32>
    %100 = arith.mulf %95, %99 : vector<8x8xf32>
    %101 = arith.addf %85, %100 : vector<8x8xf32>
    %cst_42 = arith.constant dense<0.000000e+00> : vector<8x8xf32>
    %102 = tpu.matmul %100, %89, %cst_42 {dimension_numbers = #tpu.dot_dimension_numbers<[1], [0], [0], [1], [0, 0, 1, 1], [], []>} : vector<8x8xf32>, vector<8x8xf32>, vector<8x8xf32> -> vector<8x8xf32>
    %103 = tpu.concatenate %54, %70, %86, %102 in 1 : vector<8x8xf32>, vector<8x8xf32>, vector<8x8xf32>, vector<8x8xf32> -> vector<8x32xf32>
    %cst_43 = arith.constant dense<0.000000e+00> : vector<8x32xf32>
    %104 = tpu.matmul %103, %10, %cst_43 {dimension_numbers = #tpu.dot_dimension_numbers<[1], [0], [0], [1], [0, 0, 1, 1], [], []>} : vector<8x32xf32>, vector<32x32xf32>, vector<8x32xf32> -> vector<8x32xf32>
    %c0_44 = arith.constant 0 : index
    %c0_45 = arith.constant 0 : index
    %105 = vector.load %arg9[%c0_44, %c0_45] : memref<1x32xf32, #tpu.memory_space<vmem>>, vector<1x32xf32>
    %106 = vector.broadcast %105 : vector<1x32xf32> to vector<8x32xf32>
    %107 = arith.addf %104, %106 : vector<8x32xf32>
    %c0_46 = arith.constant 0 : index
    %c0_47 = arith.constant 0 : index
    %c0_48 = arith.constant 0 : index
    %108 = vector.load %arg10[%c0_46, %c0_47, %c0_48] : memref<1x8x32xf32, #tpu.memory_space<vmem>>, vector<1x8x32xf32>
    %109 = vector.shape_cast %108 : vector<1x8x32xf32> to vector<8x32xf32>
    %110 = vector.shape_cast %107 : vector<8x32xf32> to vector<1x8x32xf32>
    tpu.vector_store %arg10[%c0_46, %c0_47, %c0_48], %110 {strides = array<i32>} : memref<1x8x32xf32, #tpu.memory_space<vmem>>, vector<1x8x32xf32>,
    %cst_49 = arith.constant 2.500000e-01 : f32
    %111 = vector.broadcast %cst_49 : f32 to vector<8x8xf32>
    %112 = arith.mulf %101, %111 : vector<8x8xf32>
    %c0_50 = arith.constant 0 : index
    %c0_51 = arith.constant 0 : index
    %c0_52 = arith.constant 0 : index
    %113 = vector.load %arg11[%c0_50, %c0_51, %c0_52] : memref<1x8x8xf32, #tpu.memory_space<vmem>>, vector<1x8x8xf32>
    %114 = vector.shape_cast %113 : vector<1x8x8xf32> to vector<8x8xf32>
    %115 = vector.shape_cast %112 : vector<8x8xf32> to vector<1x8x8xf32>
    tpu.vector_store %arg11[%c0_50, %c0_51, %c0_52], %115 {strides = array<i32>} : memref<1x8x8xf32, #tpu.memory_space<vmem>>, vector<1x8x8xf32>,
    return
  }
  func.func @transform_0(%arg0: i32) -> (i32, i32, i32) {
    %c0_i32 = arith.constant 0 : i32
    %c0_i32_0 = arith.constant 0 : i32
    %c0_i32_1 = arith.constant 0 : i32
    return %arg0, %c0_i32, %c0_i32_0 : i32, i32, i32
  }
  func.func @transform_1(%arg0: i32) -> (i32, i32, i32) {
    %c0_i32 = arith.constant 0 : i32
    %c0_i32_0 = arith.constant 0 : i32
    %c0_i32_1 = arith.constant 0 : i32
    return %arg0, %c0_i32, %c0_i32_0 : i32, i32, i32
  }
  func.func @transform_2(%arg0: i32) -> (i32, i32, i32) {
    %c0_i32 = arith.constant 0 : i32
    %c0_i32_0 = arith.constant 0 : i32
    %c0_i32_1 = arith.constant 0 : i32
    return %arg0, %c0_i32, %c0_i32_0 : i32, i32, i32
  }
  func.func @transform_3(%arg0: i32) -> (i32, i32) {
    %c0_i32 = arith.constant 0 : i32
    %c0_i32_0 = arith.constant 0 : i32
    %c0_i32_1 = arith.constant 0 : i32
    return %c0_i32, %c0_i32_0 : i32, i32
  }
  func.func @transform_4(%arg0: i32) -> (i32, i32) {
    %c0_i32 = arith.constant 0 : i32
    %c0_i32_0 = arith.constant 0 : i32
    %c0_i32_1 = arith.constant 0 : i32
    return %c0_i32, %c0_i32_0 : i32, i32
  }
  func.func @transform_5(%arg0: i32) -> (i32, i32) {
    %c0_i32 = arith.constant 0 : i32
    %c0_i32_0 = arith.constant 0 : i32
    %c0_i32_1 = arith.constant 0 : i32
    return %c0_i32, %c0_i32_0 : i32, i32
  }
  func.func @transform_6(%arg0: i32) -> (i32, i32) {
    %c0_i32 = arith.constant 0 : i32
    %c0_i32_0 = arith.constant 0 : i32
    %c0_i32_1 = arith.constant 0 : i32
    return %c0_i32, %c0_i32_0 : i32, i32
  }
  func.func @transform_7(%arg0: i32) -> (i32, i32) {
    %c0_i32 = arith.constant 0 : i32
    %c0_i32_0 = arith.constant 0 : i32
    %c0_i32_1 = arith.constant 0 : i32
    return %c0_i32, %c0_i32_0 : i32, i32
  }
  func.func @transform_8(%arg0: i32) -> (i32, i32) {
    %c0_i32 = arith.constant 0 : i32
    %c0_i32_0 = arith.constant 0 : i32
    %c0_i32_1 = arith.constant 0 : i32
    return %c0_i32, %c0_i32_0 : i32, i32
  }
  func.func @transform_9(%arg0: i32) -> (i32, i32, i32) {
    %c0_i32 = arith.constant 0 : i32
    %c0_i32_0 = arith.constant 0 : i32
    %c0_i32_1 = arith.constant 0 : i32
    return %arg0, %c0_i32, %c0_i32_0 : i32, i32, i32
  }
  func.func @transform_10(%arg0: i32) -> (i32, i32, i32) {
    %c0_i32 = arith.constant 0 : i32
    %c0_i32_0 = arith.constant 0 : i32
    %c0_i32_1 = arith.constant 0 : i32
    return %arg0, %c0_i32, %c0_i32_0 : i32, i32, i32
  }
}

</mosaic_0001>

<llo_original>
// kernel: tpu_custom_call.1
$region0: #{tpu_custom_call.1}
  #allocation0 [shape = 'u32[]', space=smem, size = 0x4, offset = 0x4, fixed_abs, tag = 'smem constant byte address 0x4 - core index']
  #allocation1 [shape = 'u32[144,128]{1,0:T(1,128)}', space=vmem, size = 0x12000, scoped, tag = 'internal scratch']
  %s0 = inlined_call_operand.vmem [shape: f32[2,8,32], index: 0, kind: input, shape index: {}]
  %s1 = inlined_call_operand.vmem [shape: f32[2,8,32], index: 1, kind: input, shape index: {}]
  %s2 = inlined_call_operand.vmem [shape: f32[2,8,32], index: 2, kind: input, shape index: {}]
  %s3 = inlined_call_operand.vmem [shape: f32[96,32], index: 3, kind: input, shape index: {}]
  %s4 = inlined_call_operand.vmem [shape: f32[3,32], index: 4, kind: input, shape index: {}]
  %s5 = inlined_call_operand.vmem [shape: f32[96,16], index: 5, kind: input, shape index: {}]
  %s6 = inlined_call_operand.vmem [shape: f32[16,32], index: 6, kind: input, shape index: {}]
  %s7 = inlined_call_operand.vmem [shape: f32[32,32], index: 7, kind: input, shape index: {}]
  %s8 = inlined_call_operand.vmem [shape: f32[1,32], index: 8, kind: input, shape index: {}]
  %s9 = inlined_call_operand.hbm [shape: f32[2,8,32], index: 9, kind: output, shape index: {0}]
  %s10 = inlined_call_operand.hbm [shape: f32[2,8,8], index: 10, kind: output, shape index: {1}]
  %11 = xla_tuple %s9, %s10
  %s12 = sld [smem:[#allocation0]]
  $region77: #{tpu_custom_call.1} parent=0
    _
  %s14 = ssub.s32 1, %s12
  %s15 = scalar_select 0, %s14, %s12
  $region1: #{tpu_custom_call.1} parent=0
    #allocation2 [shape = 'u8[8192]{0}', space=vmem, size = 0x2000, scoped, tag = 'output window, operand 0']
    #allocation3 [shape = 's32[2]{0}', space=sflag, size = 0x8, scoped, tag = 'scoped memory for tpu_custom_call.1']
    #allocation4 [shape = 'u8[8192]{0}', space=vmem, size = 0x2000, scoped, tag = 'output window, operand 1']
    #allocation5 [shape = 's32[2]{0}', space=sflag, size = 0x8, scoped, tag = 'scoped memory for tpu_custom_call.1']
    %16 = vsyncpa [#allocation3], 0
    %s17 = scalar_lea.sflag [#allocation3], 1
    %18 = vsyncpa %s17, 0
    %19 = vsyncpa [#allocation5], 0
    %s20 = scalar_lea.sflag [#allocation5], 1
    %21 = vsyncpa %s20, 0
    loop: start=0, step=1, limit=4
    $region2: #{tpu_custom_call.1} parent=1 // loop_pre_header
      _
    $region3: #{tpu_custom_call.1} parent=1 // loop_header
      %s23 = sphi 0, %s27
      %p24 = scmp.ge.s32.totalorder %s23, 4
      %s33 = sphi 0, %s35
      %s36 = sphi 0, %s33
      %s37 = sphi 0, %s36
      %s53 = sphi 0, %s37
      %s59 = sphi 0, %s61
      %s62 = sphi 0, %s59
      %s63 = sphi 0, %s62
      %s79 = sphi 0, %s63
      %s85 = sphi 0, %s87
      %s88 = sphi 0, %s85
      %s89 = sphi 0, %s88
      %s105 = sphi 0, %s89
      %s109 = sphi 0, %s109
      %s111 = sphi 0, %s109
      %s112 = sphi 0, %s111
      %s126 = sphi 0, %s112
      %s130 = sphi 0, %s130
      %s132 = sphi 0, %s130
      %s133 = sphi 0, %s132
      %s147 = sphi 0, %s133
      %s151 = sphi 0, %s151
      %s153 = sphi 0, %s151
      %s154 = sphi 0, %s153
      %s168 = sphi 0, %s154
      %s172 = sphi 0, %s172
      %s174 = sphi 0, %s172
      %s175 = sphi 0, %s174
      %s189 = sphi 0, %s175
      %s193 = sphi 0, %s193
      %s195 = sphi 0, %s193
      %s196 = sphi 0, %s195
      %s210 = sphi 0, %s196
      %s214 = sphi 0, %s214
      %s216 = sphi 0, %s214
      %s217 = sphi 0, %s216
      %s231 = sphi 0, %s217
      %s237 = sphi 0, %s239
      %s240 = sphi 0, %s237
      %s241 = sphi 0, %s240
      %s257 = sphi 0, %s241
      %s263 = sphi 0, %s265
      %s266 = sphi 0, %s263
      %s267 = sphi 0, %s266
      %s283 = sphi 0, %s267
    $region4: #{tpu_custom_call.1} parent=1 // loop_header_branch
      %26 = sbr.rel (%p24) target = $region8
    $region5: #{tpu_custom_call.1} parent=1 // loop_body
      %s28 = ssub.s32 %s23, 1
      %s29 = ssub.s32 %s23, 2
      %s30 = sadd.s32 %s23, 1
      %s31 = ssub.s32 %s23, %s30
      %p32 = scmp.eq.s32.totalorder %s31, 0
      %s34 = sadd.s32 %s33, 1
      %s35 = scalar_select %p32, %s33, %s34
      %p38 = pneg %p32
      %p39 = scmp.eq.s32.totalorder %s23, 1
      %p40 = por %p38, %p39
      %p41 = scmp.ne.s32.totalorder %s33, %s36
      %p42 = scmp.eq.s32.totalorder %s23, 0
      %p43 = por %p41, %p42
      %p44 = scmp.ne.s32.totalorder %s33, %s36
      %p45 = scmp.eq.s32.totalorder %s28, 1
      %p46 = por %p44, %p45
      %p47 = scmp.ne.s32.totalorder %s36, %s37
      %p48 = scmp.eq.s32.totalorder %s28, 0
      %p49 = por %p47, %p48
      %p50 = scmp.ne.s32.totalorder %s36, %s37
      %p51 = scmp.eq.s32.totalorder %s29, 1
      %p52 = por %p50, %p51
      %p54 = scmp.ne.s32.totalorder %s37, %s53
      %p55 = scmp.eq.s32.totalorder %s29, 0
      %p56 = por %p54, %p55
      %s57 = ssub.s32 %s23, %s30
      %p58 = scmp.eq.s32.totalorder %s57, 0
      %s60 = sadd.s32 %s59, 1
      %s61 = scalar_select %p58, %s59, %s60
      %p64 = pneg %p58
      %p65 = scmp.eq.s32.totalorder %s23, 1
      %p66 = por %p64, %p65
      %p67 = scmp.ne.s32.totalorder %s59, %s62
      %p68 = scmp.eq.s32.totalorder %s23, 0
      %p69 = por %p67, %p68
      %p70 = scmp.ne.s32.totalorder %s59, %s62
      %p71 = scmp.eq.s32.totalorder %s28, 1
      %p72 = por %p70, %p71
      %p73 = scmp.ne.s32.totalorder %s62, %s63
      %p74 = scmp.eq.s32.totalorder %s28, 0
      %p75 = por %p73, %p74
      %p76 = scmp.ne.s32.totalorder %s62, %s63
      %p77 = scmp.eq.s32.totalorder %s29, 1
      %p78 = por %p76, %p77
      %p80 = scmp.ne.s32.totalorder %s63, %s79
      %p81 = scmp.eq.s32.totalorder %s29, 0
      %p82 = por %p80, %p81
      %s83 = ssub.s32 %s23, %s30
      %p84 = scmp.eq.s32.totalorder %s83, 0
      %s86 = sadd.s32 %s85, 1
      %s87 = scalar_select %p84, %s85, %s86
      %p90 = pneg %p84
      %p91 = scmp.eq.s32.totalorder %s23, 1
      %p92 = por %p90, %p91
      %p93 = scmp.ne.s32.totalorder %s85, %s88
      %p94 = scmp.eq.s32.totalorder %s23, 0
      %p95 = por %p93, %p94
      %p96 = scmp.ne.s32.totalorder %s85, %s88
      %p97 = scmp.eq.s32.totalorder %s28, 1
      %p98 = por %p96, %p97
      %p99 = scmp.ne.s32.totalorder %s88, %s89
      %p100 = scmp.eq.s32.totalorder %s28, 0
      %p101 = por %p99, %p100
      %p102 = scmp.ne.s32.totalorder %s88, %s89
      %p103 = scmp.eq.s32.totalorder %s29, 1
      %p104 = por %p102, %p103
      %p106 = scmp.ne.s32.totalorder %s89, %s105
      %p107 = scmp.eq.s32.totalorder %s29, 0
      %p108 = por %p106, %p107
      %s110 = sadd.s32 %s109, 1
      %p113 = scmp.eq.s32.totalorder %s23, 1
      %p114 = scmp.ne.s32.totalorder %s109, %s111
      %p115 = scmp.eq.s32.totalorder %s23, 0
      %p116 = por %p114, %p115
      %p117 = scmp.ne.s32.totalorder %s109, %s111
      %p118 = scmp.eq.s32.totalorder %s28, 1
      %p119 = por %p117, %p118
      %p120 = scmp.ne.s32.totalorder %s111, %s112
      %p121 = scmp.eq.s32.totalorder %s28, 0
      %p122 = por %p120, %p121
      %p123 = scmp.ne.s32.totalorder %s111, %s112
      %p124 = scmp.eq.s32.totalorder %s29, 1
      %p125 = por %p123, %p124
      %p127 = scmp.ne.s32.totalorder %s112, %s126
      %p128 = scmp.eq.s32.totalorder %s29, 0
      %p129 = por %p127, %p128
      %s131 = sadd.s32 %s130, 1
      %p134 = scmp.eq.s32.totalorder %s23, 1
      %p135 = scmp.ne.s32.totalorder %s130, %s132
      %p136 = scmp.eq.s32.totalorder %s23, 0
      %p137 = por %p135, %p136
      %p138 = scmp.ne.s32.totalorder %s130, %s132
      %p139 = scmp.eq.s32.totalorder %s28, 1
      %p140 = por %p138, %p139
      %p141 = scmp.ne.s32.totalorder %s132, %s133
      %p142 = scmp.eq.s32.totalorder %s28, 0
      %p143 = por %p141, %p142
      %p144 = scmp.ne.s32.totalorder %s132, %s133
      %p145 = scmp.eq.s32.totalorder %s29, 1
      %p146 = por %p144, %p145
      %p148 = scmp.ne.s32.totalorder %s133, %s147
      %p149 = scmp.eq.s32.totalorder %s29, 0
      %p150 = por %p148, %p149
      %s152 = sadd.s32 %s151, 1
      %p155 = scmp.eq.s32.totalorder %s23, 1
      %p156 = scmp.ne.s32.totalorder %s151, %s153
      %p157 = scmp.eq.s32.totalorder %s23, 0
      %p158 = por %p156, %p157
      %p159 = scmp.ne.s32.totalorder %s151, %s153
      %p160 = scmp.eq.s32.totalorder %s28, 1
      %p161 = por %p159, %p160
      %p162 = scmp.ne.s32.totalorder %s153, %s154
      %p163 = scmp.eq.s32.totalorder %s28, 0
      %p164 = por %p162, %p163
      %p165 = scmp.ne.s32.totalorder %s153, %s154
      %p166 = scmp.eq.s32.totalorder %s29, 1
      %p167 = por %p165, %p166
      %p169 = scmp.ne.s32.totalorder %s154, %s168
      %p170 = scmp.eq.s32.totalorder %s29, 0
      %p171 = por %p169, %p170
      %s173 = sadd.s32 %s172, 1
      %p176 = scmp.eq.s32.totalorder %s23, 1
      %p177 = scmp.ne.s32.totalorder %s172, %s174
      %p178 = scmp.eq.s32.totalorder %s23, 0
      %p179 = por %p177, %p178
      %p180 = scmp.ne.s32.totalorder %s172, %s174
      %p181 = scmp.eq.s32.totalorder %s28, 1
      %p182 = por %p180, %p181
      %p183 = scmp.ne.s32.totalorder %s174, %s175
      %p184 = scmp.eq.s32.totalorder %s28, 0
      %p185 = por %p183, %p184
      %p186 = scmp.ne.s32.totalorder %s174, %s175
      %p187 = scmp.eq.s32.totalorder %s29, 1
      %p188 = por %p186, %p187
      %p190 = scmp.ne.s32.totalorder %s175, %s189
      %p191 = scmp.eq.s32.totalorder %s29, 0
      %p192 = por %p190, %p191
      %s194 = sadd.s32 %s193, 1
      %p197 = scmp.eq.s32.totalorder %s23, 1
      %p198 = scmp.ne.s32.totalorder %s193, %s195
      %p199 = scmp.eq.s32.totalorder %s23, 0
      %p200 = por %p198, %p199
      %p201 = scmp.ne.s32.totalorder %s193, %s195
      %p202 = scmp.eq.s32.totalorder %s28, 1
      %p203 = por %p201, %p202
      %p204 = scmp.ne.s32.totalorder %s195, %s196
      %p205 = scmp.eq.s32.totalorder %s28, 0
      %p206 = por %p204, %p205
      %p207 = scmp.ne.s32.totalorder %s195, %s196
      %p208 = scmp.eq.s32.totalorder %s29, 1
      %p209 = por %p207, %p208
      %p211 = scmp.ne.s32.totalorder %s196, %s210
      %p212 = scmp.eq.s32.totalorder %s29, 0
      %p213 = por %p211, %p212
      %s215 = sadd.s32 %s214, 1
      %p218 = scmp.eq.s32.totalorder %s23, 1
      %p219 = scmp.ne.s32.totalorder %s214, %s216
      %p220 = scmp.eq.s32.totalorder %s23, 0
      %p221 = por %p219, %p220
      %p222 = scmp.ne.s32.totalorder %s214, %s216
      %p223 = scmp.eq.s32.totalorder %s28, 1
      %p224 = por %p222, %p223
      %p225 = scmp.ne.s32.totalorder %s216, %s217
      %p226 = scmp.eq.s32.totalorder %s28, 0
      %p227 = por %p225, %p226
      %p228 = scmp.ne.s32.totalorder %s216, %s217
      %p229 = scmp.eq.s32.totalorder %s29, 1
      %p230 = por %p228, %p229
      %p232 = scmp.ne.s32.totalorder %s217, %s231
      %p233 = scmp.eq.s32.totalorder %s29, 0
      %p234 = por %p232, %p233
      %s235 = ssub.s32 %s23, %s30
      %p236 = scmp.eq.s32.totalorder %s235, 0
      %s238 = sadd.s32 %s237, 1
      %s239 = scalar_select %p236, %s237, %s238
      %p242 = pneg %p236
      %p243 = scmp.eq.s32.totalorder %s23, 1
      %p244 = por %p242, %p243
      %p245 = scmp.ne.s32.totalorder %s237, %s240
      %p246 = scmp.eq.s32.totalorder %s23, 0
      %p247 = por %p245, %p246
      %p248 = scmp.ne.s32.totalorder %s237, %s240
      %p249 = scmp.eq.s32.totalorder %s28, 1
      %p250 = por %p248, %p249
      %p251 = scmp.ne.s32.totalorder %s240, %s241
      %p252 = scmp.eq.s32.totalorder %s28, 0
      %p253 = por %p251, %p252
      %p254 = scmp.ne.s32.totalorder %s240, %s241
      %p255 = scmp.eq.s32.totalorder %s29, 1
      %p256 = por %p254, %p255
      %p258 = scmp.ne.s32.totalorder %s241, %s257
      %p259 = scmp.eq.s32.totalorder %s29, 0
      %p260 = por %p258, %p259
      %s261 = ssub.s32 %s23, %s30
      %p262 = scmp.eq.s32.totalorder %s261, 0
      %s264 = sadd.s32 %s263, 1
      %s265 = scalar_select %p262, %s263, %s264
      %p268 = pneg %p262
      %p269 = scmp.eq.s32.totalorder %s23, 1
      %p270 = por %p268, %p269
      %p271 = scmp.ne.s32.totalorder %s263, %s266
      %p272 = scmp.eq.s32.totalorder %s23, 0
      %p273 = por %p271, %p272
      %p274 = scmp.ne.s32.totalorder %s263, %s266
      %p275 = scmp.eq.s32.totalorder %s28, 1
      %p276 = por %p274, %p275
      %p277 = scmp.ne.s32.totalorder %s266, %s267
      %p278 = scmp.eq.s32.totalorder %s28, 0
      %p279 = por %p277, %p278
      %p280 = scmp.ne.s32.totalorder %s266, %s267
      %p281 = scmp.eq.s32.totalorder %s29, 1
      %p282 = por %p280, %p281
      %p284 = scmp.ne.s32.totalorder %s267, %s283
      %p285 = scmp.eq.s32.totalorder %s29, 0
      %p286 = por %p284, %p285
      %p287 = scmp.le.s32.totalorder 1, %s23
      %p288 = scmp.lt.s32.totalorder %s23, 3
      %p289 = pnand %p287, %p288
      %p290 = pneg %p289
      // Predicated region
      $region9: #{tpu_custom_call.1} parent=5 // pred_check
        _
      $region10: #{tpu_custom_call.1} parent=5 // pred_check_branch
        %292 = sbr.rel (%p289) target = $region12
      $region11: #{tpu_custom_call.1} parent=5 // pred_region
        %s293 = ssub.s32 %s23, 1
        // Predicated region
        $region13: #{tpu_custom_call.1} parent=11 // pred_check
          %p294 = pneg %p122
        $region14: #{tpu_custom_call.1} parent=11 // pred_check_branch
          %296 = sbr.rel (%p294) target = $region16
        $region15: #{tpu_custom_call.1} parent=11 // pred_region
          _
        $region16: #{tpu_custom_call.1} parent=11 // pred_fallthru
          _
        // Predicated region
        $region17: #{tpu_custom_call.1} parent=11 // pred_check
          %p297 = pneg %p143
        $region18: #{tpu_custom_call.1} parent=11 // pred_check_branch
          %299 = sbr.rel (%p297) target = $region20
        $region19: #{tpu_custom_call.1} parent=11 // pred_region
          _
        $region20: #{tpu_custom_call.1} parent=11 // pred_fallthru
          _
        // Predicated region
        $region21: #{tpu_custom_call.1} parent=11 // pred_check
          %p300 = pneg %p164
        $region22: #{tpu_custom_call.1} parent=11 // pred_check_branch
          %302 = sbr.rel (%p300) target = $region24
        $region23: #{tpu_custom_call.1} parent=11 // pred_region
          _
        $region24: #{tpu_custom_call.1} parent=11 // pred_fallthru
          _
        // Predicated region
        $region25: #{tpu_custom_call.1} parent=11 // pred_check
          %p303 = pneg %p185
        $region26: #{tpu_custom_call.1} parent=11 // pred_check_branch
          %305 = sbr.rel (%p303) target = $region28
        $region27: #{tpu_custom_call.1} parent=11 // pred_region
          _
        $region28: #{tpu_custom_call.1} parent=11 // pred_fallthru
          _
        // Predicated region
        $region29: #{tpu_custom_call.1} parent=11 // pred_check
          %p306 = pneg %p206
        $region30: #{tpu_custom_call.1} parent=11 // pred_check_branch
          %308 = sbr.rel (%p306) target = $region32
        $region31: #{tpu_custom_call.1} parent=11 // pred_region
          _
        $region32: #{tpu_custom_call.1} parent=11 // pred_fallthru
          _
        // Predicated region
        $region33: #{tpu_custom_call.1} parent=11 // pred_check
          %p309 = pneg %p227
        $region34: #{tpu_custom_call.1} parent=11 // pred_check_branch
          %311 = sbr.rel (%p309) target = $region36
        $region35: #{tpu_custom_call.1} parent=11 // pred_region
          _
        $region36: #{tpu_custom_call.1} parent=11 // pred_fallthru
          _
      $region12: #{tpu_custom_call.1} parent=5 // pred_fallthru
        _
      %p312 = scmp.lt.s32.totalorder %s23, 2
      // Predicated region
      $region37: #{tpu_custom_call.1} parent=5 // pred_check
        %p313 = pneg %p312
      $region38: #{tpu_custom_call.1} parent=5 // pred_check_branch
        %315 = sbr.rel (%p313) target = $region40
      $region39: #{tpu_custom_call.1} parent=5 // pred_region
        // Predicated region
        $region41: #{tpu_custom_call.1} parent=39 // pred_check
          %p316 = pneg %p43
        $region42: #{tpu_custom_call.1} parent=39 // pred_check_branch
          %318 = sbr.rel (%p316) target = $region44
        $region43: #{tpu_custom_call.1} parent=39 // pred_region
          %p319 = scmp.lt.s32.totalorder %s23, 1
          %s320 = scalar_select %p319, %s23, 1
          %s321 = smul.addr %s320, 8
          %s322 = scalar_lea.vmem %s0, %s321
        $region44: #{tpu_custom_call.1} parent=39 // pred_fallthru
          _
        // Predicated region
        $region45: #{tpu_custom_call.1} parent=39 // pred_check
          %p323 = pneg %p69
        $region46: #{tpu_custom_call.1} parent=39 // pred_check_branch
          %325 = sbr.rel (%p323) target = $region48
        $region47: #{tpu_custom_call.1} parent=39 // pred_region
          %p326 = scmp.lt.s32.totalorder %s23, 1
          %s327 = scalar_select %p326, %s23, 1
          %s328 = smul.addr %s327, 8
          %s329 = scalar_lea.vmem %s1, %s328
        $region48: #{tpu_custom_call.1} parent=39 // pred_fallthru
          _
        // Predicated region
        $region49: #{tpu_custom_call.1} parent=39 // pred_check
          %p330 = pneg %p95
        $region50: #{tpu_custom_call.1} parent=39 // pred_check_branch
          %332 = sbr.rel (%p330) target = $region52
        $region51: #{tpu_custom_call.1} parent=39 // pred_region
          %p333 = scmp.lt.s32.totalorder %s23, 1
          %s334 = scalar_select %p333, %s23, 1
          %s335 = smul.addr %s334, 8
          %s336 = scalar_lea.vmem %s2, %s335
        $region52: #{tpu_custom_call.1} parent=39 // pred_fallthru
          _
      $region40: #{tpu_custom_call.1} parent=5 // pred_fallthru
        _
      %p337 = scmp.le.s32.totalorder 1, %s23
      %p338 = scmp.lt.s32.totalorder %s23, 3
      %p339 = pnand %p337, %p338
      %p340 = pneg %p339
      // Predicated region
      $region53: #{tpu_custom_call.1} parent=5 // pred_check
        _
      $region54: #{tpu_custom_call.1} parent=5 // pred_check_branch
        %342 = sbr.rel (%p339) target = $region56
      $region55: #{tpu_custom_call.1} parent=5 // pred_region
        %s343 = ssub.s32 %s23, 1
        %p344 = scmp.lt.s32.totalorder %s28, 1
        %s345 = scalar_select %p344, %s28, 1
        %s346 = smul.addr %s345, 8
        %s347 = scalar_lea.vmem %s0, %s346
        %p348 = pneg %p49
        %p349 = pneg %p46
        %p350 = scmp.lt.s32.totalorder %s28, 1
        %s351 = scalar_select %p350, %s28, 1
        %s352 = smul.addr %s351, 8
        %s353 = scalar_lea.vmem %s1, %s352
        %p354 = pneg %p75
        %p355 = pneg %p72
        %p356 = scmp.lt.s32.totalorder %s28, 1
        %s357 = scalar_select %p356, %s28, 1
        %s358 = smul.addr %s357, 8
        %s359 = scalar_lea.vmem %s2, %s358
        %p360 = pneg %p101
        %p361 = pneg %p98
        %p362 = pneg %p122
        %p363 = pneg %p119
        %p364 = pneg %p143
        %p365 = pneg %p140
        %p366 = pneg %p164
        %p367 = pneg %p161
        %p368 = pneg %p185
        %p369 = pneg %p182
        %p370 = pneg %p206
        %p371 = pneg %p203
        %p372 = pneg %p227
        %p373 = pneg %p224
        %p374 = pneg %p253
        %p375 = pneg %p250
        %s376 = sand.u32 %s240, 1
        %s377 = scalar_lea.sflag [#allocation3], %s376
        %s378 = sand.u32 %s240, 1
        %s379 = smul.addr %s378, 8
        %s380 = scalar_lea.vmem [#allocation2], %s379
        %p381 = pneg %p279
        %p382 = pneg %p276
        %s383 = sand.u32 %s266, 1
        %s384 = scalar_lea.sflag [#allocation5], %s383
        %s385 = sand.u32 %s266, 1
        %s386 = smul.addr %s385, 8
        %s387 = scalar_lea.vmem [#allocation4], %s386
        %p388 = scmp.lt.s32.totalorder %s28, 1
        %s389 = scalar_select %p388, %s28, 1
        %s390 = smul.addr %s389, 8
        %s391 = scalar_lea.vmem %s0, %s390
        %p392 = scmp.lt.s32.totalorder %s28, 1
        %s393 = scalar_select %p392, %s28, 1
        %s394 = smul.addr %s393, 8
        %s395 = scalar_lea.vmem %s1, %s394
        %p396 = scmp.lt.s32.totalorder %s28, 1
        %s397 = scalar_select %p396, %s28, 1
        %s398 = smul.addr %s397, 8
        %s399 = scalar_lea.vmem %s2, %s398
        %v400 = vld [vmem:[%s391] sm:$0xff]
        %v401 = vld [vmem:[%s395] sm:$0xff]
        %v402 = vld [vmem:[%s399] sm:$0xff]
        %v403 = vld [vmem:[%s3] sm:$0xff]
        %v404 = vld [vmem:[%s3 + $0x8] sm:$0xff]
        %v405 = vld [vmem:[%s3 + $0x10] sm:$0xff]
        %v406 = vld [vmem:[%s3 + $0x18] sm:$0xff]
        %v407 = vld [vmem:[%s3 + $0x20] sm:$0xff]
        %v408 = vld [vmem:[%s3 + $0x28] sm:$0xff]
        %v409 = vld [vmem:[%s3 + $0x30] sm:$0xff]
        %v410 = vld [vmem:[%s3 + $0x38] sm:$0xff]
        %v411 = vld [vmem:[%s3 + $0x40] sm:$0xff]
        %v412 = vld [vmem:[%s3 + $0x48] sm:$0xff]
        %v413 = vld [vmem:[%s3 + $0x50] sm:$0xff]
        %v414 = vld [vmem:[%s3 + $0x58] sm:$0xff]
        %v415 = vld [vmem:[%s5] sm:$0xff]
        %v416 = vld [vmem:[%s5 + $0x8] sm:$0xff]
        %v417 = vld [vmem:[%s5 + $0x10] sm:$0xff]
        %v418 = vld [vmem:[%s5 + $0x18] sm:$0xff]
        %v419 = vld [vmem:[%s5 + $0x20] sm:$0xff]
        %v420 = vld [vmem:[%s5 + $0x28] sm:$0xff]
        %v421 = vld [vmem:[%s5 + $0x30] sm:$0xff]
        %v422 = vld [vmem:[%s5 + $0x38] sm:$0xff]
        %v423 = vld [vmem:[%s5 + $0x40] sm:$0xff]
        %v424 = vld [vmem:[%s5 + $0x48] sm:$0xff]
        %v425 = vld [vmem:[%s5 + $0x50] sm:$0xff]
        %v426 = vld [vmem:[%s5 + $0x58] sm:$0xff]
        %v427 = vld [vmem:[%s6] sm:$0xff]
        %v428 = vld [vmem:[%s6 + $0x8] sm:$0xff]
        %v429 = vld [vmem:[%s4] sm:$0x7]
        %v430 = vld [vmem:[%s7] sm:$0xff]
        %v431 = vld [vmem:[%s7 + $0x8] sm:$0xff]
        %v432 = vld [vmem:[%s7 + $0x10] sm:$0xff]
        %v433 = vld [vmem:[%s7 + $0x18] sm:$0xff]
        %vm434 = vcmask 261120
        %v436 = vsel %vm434, %v400, 0
        %v439 = vsel %vm434, %v427, 0
        %v442 = vsel %vm434, %v428, 0
        %444 = vmatprep.subr.mxu0 0.0
        %445 = vmatpush1.xpose.msra.mxu0 %v439
        %446 = vmatprep.subr.mxu0 0.0
        %447 = vmatpush1.xpose.msra.mxu0 %v442
        %448 = vmatprep.subr.mxu0 0.0
        %449 = vmatpush1.xpose.msra.mxu0 0.0
        %450 = vmatprep.subr.mxu0 0.0
        %451 = vmatpush1.xpose.msra.mxu0 0.0
        %452 = vmatprep.subr.mxu0 0.0
        %453 = vmatpush1.xpose.msra.mxu0 0.0
        %454 = vmatprep.subr.mxu0 0.0
        %455 = vmatpush1.xpose.msra.mxu0 0.0
        %456 = vmatprep.subr.mxu0 0.0
        %457 = vmatpush1.xpose.msra.mxu0 0.0
        %458 = vmatprep.subr.mxu0 0.0
        %459 = vmatpush1.xpose.msra.mxu0 0.0
        %460 = vmatprep.subr.mxu0 0.0
        %461 = vmatpush1.xpose.msra.mxu0 0.0
        %462 = vmatprep.subr.mxu0 0.0
        %463 = vmatpush1.xpose.msra.mxu0 0.0
        %464 = vmatprep.subr.mxu0 0.0
        %465 = vmatpush1.xpose.msra.mxu0 0.0
        %466 = vmatprep.subr.mxu0 0.0
        %467 = vmatpush1.xpose.msra.mxu0 0.0
        %468 = vmatprep.subr.mxu0 0.0
        %469 = vmatpush1.xpose.msra.mxu0 0.0
        %470 = vmatprep.subr.mxu0 0.0
        %471 = vmatpush1.xpose.msra.mxu0 0.0
        %472 = vmatprep.subr.mxu0 0.0
        %473 = vmatpush1.xpose.msra.mxu0 0.0
        %474 = vmatprep.subr.mxu0 0.0
        %475 = vmatpush1.xpose.msra.mxu0 0.0
        %476 = vmatprep.subr.mxu0 0.0
        %477 = vmatpush1.xpose.msra.mxu0 0.0
        %478 = vmatprep.subr.mxu0 0.0
        %479 = vmatpush1.xpose.msra.mxu0 0.0
        %480 = vmatprep.subr.mxu0 0.0
        %481 = vmatpush1.xpose.msra.mxu0 0.0
        %482 = vmatprep.subr.mxu0 0.0
        %483 = vmatpush1.xpose.msra.mxu0 0.0
        %484 = vmatprep.subr.mxu0 0.0
        %485 = vmatpush1.xpose.msra.mxu0 0.0
        %486 = vmatprep.subr.mxu0 0.0
        %487 = vmatpush1.xpose.msra.mxu0 0.0
        %488 = vmatprep.subr.mxu0 0.0
        %489 = vmatpush1.xpose.msra.mxu0 0.0
        %490 = vmatprep.subr.mxu0 0.0
        %491 = vmatpush1.xpose.msra.mxu0 0.0
        %492 = vmatprep.subr.mxu0 0.0
        %493 = vmatpush1.xpose.msra.mxu0 0.0
        %494 = vmatprep.subr.mxu0 0.0
        %495 = vmatpush1.xpose.msra.mxu0 0.0
        %496 = vmatprep.subr.mxu0 0.0
        %497 = vmatpush1.xpose.msra.mxu0 0.0
        %498 = vmatprep.subr.mxu0 0.0
        %499 = vmatpush1.xpose.msra.mxu0 0.0
        %500 = vmatprep.subr.mxu0 0.0
        %501 = vmatpush1.xpose.msra.mxu0 0.0
        %502 = vmatprep.subr.mxu0 0.0
        %503 = vmatpush1.xpose.msra.mxu0 0.0
        %504 = vmatprep.subr.mxu0 0.0
        %505 = vmatpush1.xpose.msra.mxu0 0.0
        %506 = vmatprep.subr.mxu0 0.0
        %507 = vmatpush1.xpose.msra.mxu0 0.0
        %508 = vmatprep.mubr.f32.mxu0 0.0
        %509 = vmatmul.mubr.f32.gmra.mrb[0].mxu0 %v436
        %v510 = vpop.f32.mrb[0].mxu0
        %v511 = vadd.f32 0.0, %v510
        %v512 = vpop.f32.mrb[0].mxu0
        %513 = vdwg.mxu0
        %v515 = vsel %vm434, %v401, 0
        %517 = vmatprep.subr.mxu0 0.0
        %518 = vmatpush1.xpose.msra.mxu0 %v439
        %519 = vmatprep.subr.mxu0 0.0
        %520 = vmatpush1.xpose.msra.mxu0 %v442
        %521 = vmatprep.subr.mxu0 0.0
        %522 = vmatpush1.xpose.msra.mxu0 0.0
        %523 = vmatprep.subr.mxu0 0.0
        %524 = vmatpush1.xpose.msra.mxu0 0.0
        %525 = vmatprep.subr.mxu0 0.0
        %526 = vmatpush1.xpose.msra.mxu0 0.0
        %527 = vmatprep.subr.mxu0 0.0
        %528 = vmatpush1.xpose.msra.mxu0 0.0
        %529 = vmatprep.subr.mxu0 0.0
        %530 = vmatpush1.xpose.msra.mxu0 0.0
        %531 = vmatprep.subr.mxu0 0.0
        %532 = vmatpush1.xpose.msra.mxu0 0.0
        %533 = vmatprep.subr.mxu0 0.0
        %534 = vmatpush1.xpose.msra.mxu0 0.0
        %535 = vmatprep.subr.mxu0 0.0
        %536 = vmatpush1.xpose.msra.mxu0 0.0
        %537 = vmatprep.subr.mxu0 0.0
        %538 = vmatpush1.xpose.msra.mxu0 0.0
        %539 = vmatprep.subr.mxu0 0.0
        %540 = vmatpush1.xpose.msra.mxu0 0.0
        %541 = vmatprep.subr.mxu0 0.0
        %542 = vmatpush1.xpose.msra.mxu0 0.0
        %543 = vmatprep.subr.mxu0 0.0
        %544 = vmatpush1.xpose.msra.mxu0 0.0
        %545 = vmatprep.subr.mxu0 0.0
        %546 = vmatpush1.xpose.msra.mxu0 0.0
        %547 = vmatprep.subr.mxu0 0.0
        %548 = vmatpush1.xpose.msra.mxu0 0.0
        %549 = vmatprep.subr.mxu0 0.0
        %550 = vmatpush1.xpose.msra.mxu0 0.0
        %551 = vmatprep.subr.mxu0 0.0
        %552 = vmatpush1.xpose.msra.mxu0 0.0
        %553 = vmatprep.subr.mxu0 0.0
        %554 = vmatpush1.xpose.msra.mxu0 0.0
        %555 = vmatprep.subr.mxu0 0.0
        %556 = vmatpush1.xpose.msra.mxu0 0.0
        %557 = vmatprep.subr.mxu0 0.0
        %558 = vmatpush1.xpose.msra.mxu0 0.0
        %559 = vmatprep.subr.mxu0 0.0
        %560 = vmatpush1.xpose.msra.mxu0 0.0
        %561 = vmatprep.subr.mxu0 0.0
        %562 = vmatpush1.xpose.msra.mxu0 0.0
        %563 = vmatprep.subr.mxu0 0.0
        %564 = vmatpush1.xpose.msra.mxu0 0.0
        %565 = vmatprep.subr.mxu0 0.0
        %566 = vmatpush1.xpose.msra.mxu0 0.0
        %567 = vmatprep.subr.mxu0 0.0
        %568 = vmatpush1.xpose.msra.mxu0 0.0
        %569 = vmatprep.subr.mxu0 0.0
        %570 = vmatpush1.xpose.msra.mxu0 0.0
        %571 = vmatprep.subr.mxu0 0.0
        %572 = vmatpush1.xpose.msra.mxu0 0.0
        %573 = vmatprep.subr.mxu0 0.0
        %574 = vmatpush1.xpose.msra.mxu0 0.0
        %575 = vmatprep.subr.mxu0 0.0
        %576 = vmatpush1.xpose.msra.mxu0 0.0
        %577 = vmatprep.subr.mxu0 0.0
        %578 = vmatpush1.xpose.msra.mxu0 0.0
        %579 = vmatprep.subr.mxu0 0.0
        %580 = vmatpush1.xpose.msra.mxu0 0.0
        %581 = vmatprep.mubr.f32.mxu0 0.0
        %582 = vmatmul.mubr.f32.gmra.mrb[0].mxu0 %v515
        %v583 = vpop.f32.mrb[0].mxu0
        %v584 = vadd.f32 0.0, %v583
        %v585 = vpop.f32.mrb[0].mxu0
        %586 = vdwg.mxu0
        %v588 = vsel %vm434, %v402, 0
        %590 = vmatprep.subr.mxu0 0.0
        %591 = vmatpush1.xpose.msra.mxu0 %v439
        %592 = vmatprep.subr.mxu0 0.0
        %593 = vmatpush1.xpose.msra.mxu0 %v442
        %594 = vmatprep.subr.mxu0 0.0
        %595 = vmatpush1.xpose.msra.mxu0 0.0
        %596 = vmatprep.subr.mxu0 0.0
        %597 = vmatpush1.xpose.msra.mxu0 0.0
        %598 = vmatprep.subr.mxu0 0.0
        %599 = vmatpush1.xpose.msra.mxu0 0.0
        %600 = vmatprep.subr.mxu0 0.0
        %601 = vmatpush1.xpose.msra.mxu0 0.0
        %602 = vmatprep.subr.mxu0 0.0
        %603 = vmatpush1.xpose.msra.mxu0 0.0
        %604 = vmatprep.subr.mxu0 0.0
        %605 = vmatpush1.xpose.msra.mxu0 0.0
        %606 = vmatprep.subr.mxu0 0.0
        %607 = vmatpush1.xpose.msra.mxu0 0.0
        %608 = vmatprep.subr.mxu0 0.0
        %609 = vmatpush1.xpose.msra.mxu0 0.0
        %610 = vmatprep.subr.mxu0 0.0
        %611 = vmatpush1.xpose.msra.mxu0 0.0
        %612 = vmatprep.subr.mxu0 0.0
        %613 = vmatpush1.xpose.msra.mxu0 0.0
        %614 = vmatprep.subr.mxu0 0.0
        %615 = vmatpush1.xpose.msra.mxu0 0.0
        %616 = vmatprep.subr.mxu0 0.0
        %617 = vmatpush1.xpose.msra.mxu0 0.0
        %618 = vmatprep.subr.mxu0 0.0
        %619 = vmatpush1.xpose.msra.mxu0 0.0
        %620 = vmatprep.subr.mxu0 0.0
        %621 = vmatpush1.xpose.msra.mxu0 0.0
        %622 = vmatprep.subr.mxu0 0.0
        %623 = vmatpush1.xpose.msra.mxu0 0.0
        %624 = vmatprep.subr.mxu0 0.0
        %625 = vmatpush1.xpose.msra.mxu0 0.0
        %626 = vmatprep.subr.mxu0 0.0
        %627 = vmatpush1.xpose.msra.mxu0 0.0
        %628 = vmatprep.subr.mxu0 0.0
        %629 = vmatpush1.xpose.msra.mxu0 0.0
        %630 = vmatprep.subr.mxu0 0.0
        %631 = vmatpush1.xpose.msra.mxu0 0.0
        %632 = vmatprep.subr.mxu0 0.0
        %633 = vmatpush1.xpose.msra.mxu0 0.0
        %634 = vmatprep.subr.mxu0 0.0
        %635 = vmatpush1.xpose.msra.mxu0 0.0
        %636 = vmatprep.subr.mxu0 0.0
        %637 = vmatpush1.xpose.msra.mxu0 0.0
        %638 = vmatprep.subr.mxu0 0.0
        %639 = vmatpush1.xpose.msra.mxu0 0.0
        %640 = vmatprep.subr.mxu0 0.0
        %641 = vmatpush1.xpose.msra.mxu0 0.0
        %642 = vmatprep.subr.mxu0 0.0
        %643 = vmatpush1.xpose.msra.mxu0 0.0
        %644 = vmatprep.subr.mxu0 0.0
        %645 = vmatpush1.xpose.msra.mxu0 0.0
        %646 = vmatprep.subr.mxu0 0.0
        %647 = vmatpush1.xpose.msra.mxu0 0.0
        %648 = vmatprep.subr.mxu0 0.0
        %649 = vmatpush1.xpose.msra.mxu0 0.0
        %650 = vmatprep.subr.mxu0 0.0
        %651 = vmatpush1.xpose.msra.mxu0 0.0
        %652 = vmatprep.subr.mxu0 0.0
        %653 = vmatpush1.xpose.msra.mxu0 0.0
        %654 = vmatprep.mubr.f32.mxu0 0.0
        %655 = vmatmul.mubr.f32.gmra.mrb[0].mxu0 %v588
        %v656 = vpop.f32.mrb[0].mxu0
        %v657 = vadd.f32 0.0, %v656
        %v658 = vpop.f32.mrb[0].mxu0
        %659 = vdwg.mxu0
        %vm660 = vcmask 130048
        %v662 = vsel %vm660, %v511, 0
        %v665 = vsel %vm660, %v415, 0
        %v668 = vsel %vm660, %v416, 0
        %v671 = vsel %vm660, %v417, 0
        %v674 = vsel %vm660, %v418, 0
        %676 = vmatprep.subr.mxu0 0.0
        %677 = vmatpush1.xpose.msra.mxu0 %v665
        %678 = vmatprep.subr.mxu0 0.0
        %679 = vmatpush1.xpose.msra.mxu0 %v668
        %680 = vmatprep.subr.mxu0 0.0
        %681 = vmatpush1.xpose.msra.mxu0 %v671
        %682 = vmatprep.subr.mxu0 0.0
        %683 = vmatpush1.xpose.msra.mxu0 %v674
        %684 = vmatprep.subr.mxu0 0.0
        %685 = vmatpush1.xpose.msra.mxu0 0.0
        %686 = vmatprep.subr.mxu0 0.0
        %687 = vmatpush1.xpose.msra.mxu0 0.0
        %688 = vmatprep.subr.mxu0 0.0
        %689 = vmatpush1.xpose.msra.mxu0 0.0
        %690 = vmatprep.subr.mxu0 0.0
        %691 = vmatpush1.xpose.msra.mxu0 0.0
        %692 = vmatprep.subr.mxu0 0.0
        %693 = vmatpush1.xpose.msra.mxu0 0.0
        %694 = vmatprep.subr.mxu0 0.0
        %695 = vmatpush1.xpose.msra.mxu0 0.0
        %696 = vmatprep.subr.mxu0 0.0
        %697 = vmatpush1.xpose.msra.mxu0 0.0
        %698 = vmatprep.subr.mxu0 0.0
        %699 = vmatpush1.xpose.msra.mxu0 0.0
        %700 = vmatprep.subr.mxu0 0.0
        %701 = vmatpush1.xpose.msra.mxu0 0.0
        %702 = vmatprep.subr.mxu0 0.0
        %703 = vmatpush1.xpose.msra.mxu0 0.0
        %704 = vmatprep.subr.mxu0 0.0
        %705 = vmatpush1.xpose.msra.mxu0 0.0
        %706 = vmatprep.subr.mxu0 0.0
        %707 = vmatpush1.xpose.msra.mxu0 0.0
        %708 = vmatprep.subr.mxu0 0.0
        %709 = vmatpush1.xpose.msra.mxu0 0.0
        %710 = vmatprep.subr.mxu0 0.0
        %711 = vmatpush1.xpose.msra.mxu0 0.0
        %712 = vmatprep.subr.mxu0 0.0
        %713 = vmatpush1.xpose.msra.mxu0 0.0
        %714 = vmatprep.subr.mxu0 0.0
        %715 = vmatpush1.xpose.msra.mxu0 0.0
        %716 = vmatprep.subr.mxu0 0.0
        %717 = vmatpush1.xpose.msra.mxu0 0.0
        %718 = vmatprep.subr.mxu0 0.0
        %719 = vmatpush1.xpose.msra.mxu0 0.0
        %720 = vmatprep.subr.mxu0 0.0
        %721 = vmatpush1.xpose.msra.mxu0 0.0
        %722 = vmatprep.subr.mxu0 0.0
        %723 = vmatpush1.xpose.msra.mxu0 0.0
        %724 = vmatprep.subr.mxu0 0.0
        %725 = vmatpush1.xpose.msra.mxu0 0.0
        %726 = vmatprep.subr.mxu0 0.0
        %727 = vmatpush1.xpose.msra.mxu0 0.0
        %728 = vmatprep.subr.mxu0 0.0
        %729 = vmatpush1.xpose.msra.mxu0 0.0
        %730 = vmatprep.subr.mxu0 0.0
        %731 = vmatpush1.xpose.msra.mxu0 0.0
        %732 = vmatprep.subr.mxu0 0.0
        %733 = vmatpush1.xpose.msra.mxu0 0.0
        %734 = vmatprep.subr.mxu0 0.0
        %735 = vmatpush1.xpose.msra.mxu0 0.0
        %736 = vmatprep.subr.mxu0 0.0
        %737 = vmatpush1.xpose.msra.mxu0 0.0
        %738 = vmatprep.subr.mxu0 0.0
        %739 = vmatpush1.xpose.msra.mxu0 0.0
        %740 = vmatprep.mubr.f32.mxu0 0.0
        %741 = vmatmul.mubr.f32.gmra.mrb[0].mxu0 %v662
        %v742 = vpop.f32.mrb[0].mxu0
        %v743 = vadd.f32 0.0, %v742
        %v744 = vpop.f32.mrb[0].mxu0
        %745 = vdwg.mxu0
        %v747 = vsel %vm434, %v403, 0
        %v750 = vsel %vm434, %v404, 0
        %v753 = vsel %vm434, %v405, 0
        %v756 = vsel %vm434, %v406, 0
        %758 = vmatprep.subr.mxu0 0.0
        %759 = vmatpush1.xpose.msra.mxu0 %v747
        %760 = vmatprep.subr.mxu0 0.0
        %761 = vmatpush1.xpose.msra.mxu0 %v750
        %762 = vmatprep.subr.mxu0 0.0
        %763 = vmatpush1.xpose.msra.mxu0 %v753
        %764 = vmatprep.subr.mxu0 0.0
        %765 = vmatpush1.xpose.msra.mxu0 %v756
        %766 = vmatprep.subr.mxu0 0.0
        %767 = vmatpush1.xpose.msra.mxu0 0.0
        %768 = vmatprep.subr.mxu0 0.0
        %769 = vmatpush1.xpose.msra.mxu0 0.0
        %770 = vmatprep.subr.mxu0 0.0
        %771 = vmatpush1.xpose.msra.mxu0 0.0
        %772 = vmatprep.subr.mxu0 0.0
        %773 = vmatpush1.xpose.msra.mxu0 0.0
        %774 = vmatprep.subr.mxu0 0.0
        %775 = vmatpush1.xpose.msra.mxu0 0.0
        %776 = vmatprep.subr.mxu0 0.0
        %777 = vmatpush1.xpose.msra.mxu0 0.0
        %778 = vmatprep.subr.mxu0 0.0
        %779 = vmatpush1.xpose.msra.mxu0 0.0
        %780 = vmatprep.subr.mxu0 0.0
        %781 = vmatpush1.xpose.msra.mxu0 0.0
        %782 = vmatprep.subr.mxu0 0.0
        %783 = vmatpush1.xpose.msra.mxu0 0.0
        %784 = vmatprep.subr.mxu0 0.0
        %785 = vmatpush1.xpose.msra.mxu0 0.0
        %786 = vmatprep.subr.mxu0 0.0
        %787 = vmatpush1.xpose.msra.mxu0 0.0
        %788 = vmatprep.subr.mxu0 0.0
        %789 = vmatpush1.xpose.msra.mxu0 0.0
        %790 = vmatprep.subr.mxu0 0.0
        %791 = vmatpush1.xpose.msra.mxu0 0.0
        %792 = vmatprep.subr.mxu0 0.0
        %793 = vmatpush1.xpose.msra.mxu0 0.0
        %794 = vmatprep.subr.mxu0 0.0
        %795 = vmatpush1.xpose.msra.mxu0 0.0
        %796 = vmatprep.subr.mxu0 0.0
        %797 = vmatpush1.xpose.msra.mxu0 0.0
        %798 = vmatprep.subr.mxu0 0.0
        %799 = vmatpush1.xpose.msra.mxu0 0.0
        %800 = vmatprep.subr.mxu0 0.0
        %801 = vmatpush1.xpose.msra.mxu0 0.0
        %802 = vmatprep.subr.mxu0 0.0
        %803 = vmatpush1.xpose.msra.mxu0 0.0
        %804 = vmatprep.subr.mxu0 0.0
        %805 = vmatpush1.xpose.msra.mxu0 0.0
        %806 = vmatprep.subr.mxu0 0.0
        %807 = vmatpush1.xpose.msra.mxu0 0.0
        %808 = vmatprep.subr.mxu0 0.0
        %809 = vmatpush1.xpose.msra.mxu0 0.0
        %810 = vmatprep.subr.mxu0 0.0
        %811 = vmatpush1.xpose.msra.mxu0 0.0
        %812 = vmatprep.subr.mxu0 0.0
        %813 = vmatpush1.xpose.msra.mxu0 0.0
        %814 = vmatprep.subr.mxu0 0.0
        %815 = vmatpush1.xpose.msra.mxu0 0.0
        %816 = vmatprep.subr.mxu0 0.0
        %817 = vmatpush1.xpose.msra.mxu0 0.0
        %818 = vmatprep.subr.mxu0 0.0
        %819 = vmatpush1.xpose.msra.mxu0 0.0
        %820 = vmatprep.subr.mxu0 0.0
        %821 = vmatpush1.xpose.msra.mxu0 0.0
        %822 = vmatprep.mubr.f32.mxu0 0.0
        %823 = vmatmul.mubr.f32.gmra.mrb[0].mxu0 %v436
        %v824 = vpop.f32.mrb[0].mxu0
        %v825 = vadd.f32 %v743, %v824
        %v826 = vpop.f32.mrb[0].mxu0
        %827 = vdwg.mxu0
        %v828 = vlaneseq
        %v829 = vshrl.u32 %v828, 7
        %v830 = vsub.s32 0, %v829
        %v831 = vrot.slane %v429, %v830
        %v832 = vadd.f32 %v825, %v831
        %v833 = vmul.f32 %v832, 0.35355338
        %v835 = vsel %vm660, %v584, 0
        %v838 = vsel %vm660, %v419, 0
        %v841 = vsel %vm660, %v420, 0
        %v844 = vsel %vm660, %v421, 0
        %v847 = vsel %vm660, %v422, 0
        %849 = vmatprep.subr.mxu0 0.0
        %850 = vmatpush1.xpose.msra.mxu0 %v838
        %851 = vmatprep.subr.mxu0 0.0
        %852 = vmatpush1.xpose.msra.mxu0 %v841
        %853 = vmatprep.subr.mxu0 0.0
        %854 = vmatpush1.xpose.msra.mxu0 %v844
        %855 = vmatprep.subr.mxu0 0.0
        %856 = vmatpush1.xpose.msra.mxu0 %v847
        %857 = vmatprep.subr.mxu0 0.0
        %858 = vmatpush1.xpose.msra.mxu0 0.0
        %859 = vmatprep.subr.mxu0 0.0
        %860 = vmatpush1.xpose.msra.mxu0 0.0
        %861 = vmatprep.subr.mxu0 0.0
        %862 = vmatpush1.xpose.msra.mxu0 0.0
        %863 = vmatprep.subr.mxu0 0.0
        %864 = vmatpush1.xpose.msra.mxu0 0.0
        %865 = vmatprep.subr.mxu0 0.0
        %866 = vmatpush1.xpose.msra.mxu0 0.0
        %867 = vmatprep.subr.mxu0 0.0
        %868 = vmatpush1.xpose.msra.mxu0 0.0
        %869 = vmatprep.subr.mxu0 0.0
        %870 = vmatpush1.xpose.msra.mxu0 0.0
        %871 = vmatprep.subr.mxu0 0.0
        %872 = vmatpush1.xpose.msra.mxu0 0.0
        %873 = vmatprep.subr.mxu0 0.0
        %874 = vmatpush1.xpose.msra.mxu0 0.0
        %875 = vmatprep.subr.mxu0 0.0
        %876 = vmatpush1.xpose.msra.mxu0 0.0
        %877 = vmatprep.subr.mxu0 0.0
        %878 = vmatpush1.xpose.msra.mxu0 0.0
        %879 = vmatprep.subr.mxu0 0.0
        %880 = vmatpush1.xpose.msra.mxu0 0.0
        %881 = vmatprep.subr.mxu0 0.0
        %882 = vmatpush1.xpose.msra.mxu0 0.0
        %883 = vmatprep.subr.mxu0 0.0
        %884 = vmatpush1.xpose.msra.mxu0 0.0
        %885 = vmatprep.subr.mxu0 0.0
        %886 = vmatpush1.xpose.msra.mxu0 0.0
        %887 = vmatprep.subr.mxu0 0.0
        %888 = vmatpush1.xpose.msra.mxu0 0.0
        %889 = vmatprep.subr.mxu0 0.0
        %890 = vmatpush1.xpose.msra.mxu0 0.0
        %891 = vmatprep.subr.mxu0 0.0
        %892 = vmatpush1.xpose.msra.mxu0 0.0
        %893 = vmatprep.subr.mxu0 0.0
        %894 = vmatpush1.xpose.msra.mxu0 0.0
        %895 = vmatprep.subr.mxu0 0.0
        %896 = vmatpush1.xpose.msra.mxu0 0.0
        %897 = vmatprep.subr.mxu0 0.0
        %898 = vmatpush1.xpose.msra.mxu0 0.0
        %899 = vmatprep.subr.mxu0 0.0
        %900 = vmatpush1.xpose.msra.mxu0 0.0
        %901 = vmatprep.subr.mxu0 0.0
        %902 = vmatpush1.xpose.msra.mxu0 0.0
        %903 = vmatprep.subr.mxu0 0.0
        %904 = vmatpush1.xpose.msra.mxu0 0.0
        %905 = vmatprep.subr.mxu0 0.0
        %906 = vmatpush1.xpose.msra.mxu0 0.0
        %907 = vmatprep.subr.mxu0 0.0
        %908 = vmatpush1.xpose.msra.mxu0 0.0
        %909 = vmatprep.subr.mxu0 0.0
        %910 = vmatpush1.xpose.msra.mxu0 0.0
        %911 = vmatprep.subr.mxu0 0.0
        %912 = vmatpush1.xpose.msra.mxu0 0.0
        %913 = vmatprep.mubr.f32.mxu0 0.0
        %914 = vmatmul.mubr.f32.gmra.mrb[0].mxu0 %v835
        %v915 = vpop.f32.mrb[0].mxu0
        %v916 = vadd.f32 0.0, %v915
        %v917 = vpop.f32.mrb[0].mxu0
        %918 = vdwg.mxu0
        %v920 = vsel %vm434, %v407, 0
        %v923 = vsel %vm434, %v408, 0
        %v926 = vsel %vm434, %v409, 0
        %v929 = vsel %vm434, %v410, 0
        %931 = vmatprep.subr.mxu0 0.0
        %932 = vmatpush1.xpose.msra.mxu0 %v920
        %933 = vmatprep.subr.mxu0 0.0
        %934 = vmatpush1.xpose.msra.mxu0 %v923
        %935 = vmatprep.subr.mxu0 0.0
        %936 = vmatpush1.xpose.msra.mxu0 %v926
        %937 = vmatprep.subr.mxu0 0.0
        %938 = vmatpush1.xpose.msra.mxu0 %v929
        %939 = vmatprep.subr.mxu0 0.0
        %940 = vmatpush1.xpose.msra.mxu0 0.0
        %941 = vmatprep.subr.mxu0 0.0
        %942 = vmatpush1.xpose.msra.mxu0 0.0
        %943 = vmatprep.subr.mxu0 0.0
        %944 = vmatpush1.xpose.msra.mxu0 0.0
        %945 = vmatprep.subr.mxu0 0.0
        %946 = vmatpush1.xpose.msra.mxu0 0.0
        %947 = vmatprep.subr.mxu0 0.0
        %948 = vmatpush1.xpose.msra.mxu0 0.0
        %949 = vmatprep.subr.mxu0 0.0
        %950 = vmatpush1.xpose.msra.mxu0 0.0
        %951 = vmatprep.subr.mxu0 0.0
        %952 = vmatpush1.xpose.msra.mxu0 0.0
        %953 = vmatprep.subr.mxu0 0.0
        %954 = vmatpush1.xpose.msra.mxu0 0.0
        %955 = vmatprep.subr.mxu0 0.0
        %956 = vmatpush1.xpose.msra.mxu0 0.0
        %957 = vmatprep.subr.mxu0 0.0
        %958 = vmatpush1.xpose.msra.mxu0 0.0
        %959 = vmatprep.subr.mxu0 0.0
        %960 = vmatpush1.xpose.msra.mxu0 0.0
        %961 = vmatprep.subr.mxu0 0.0
        %962 = vmatpush1.xpose.msra.mxu0 0.0
        %963 = vmatprep.subr.mxu0 0.0
        %964 = vmatpush1.xpose.msra.mxu0 0.0
        %965 = vmatprep.subr.mxu0 0.0
        %966 = vmatpush1.xpose.msra.mxu0 0.0
        %967 = vmatprep.subr.mxu0 0.0
        %968 = vmatpush1.xpose.msra.mxu0 0.0
        %969 = vmatprep.subr.mxu0 0.0
        %970 = vmatpush1.xpose.msra.mxu0 0.0
        %971 = vmatprep.subr.mxu0 0.0
        %972 = vmatpush1.xpose.msra.mxu0 0.0
        %973 = vmatprep.subr.mxu0 0.0
        %974 = vmatpush1.xpose.msra.mxu0 0.0
        %975 = vmatprep.subr.mxu0 0.0
        %976 = vmatpush1.xpose.msra.mxu0 0.0
        %977 = vmatprep.subr.mxu0 0.0
        %978 = vmatpush1.xpose.msra.mxu0 0.0
        %979 = vmatprep.subr.mxu0 0.0
        %980 = vmatpush1.xpose.msra.mxu0 0.0
        %981 = vmatprep.subr.mxu0 0.0
        %982 = vmatpush1.xpose.msra.mxu0 0.0
        %983 = vmatprep.subr.mxu0 0.0
        %984 = vmatpush1.xpose.msra.mxu0 0.0
        %985 = vmatprep.subr.mxu0 0.0
        %986 = vmatpush1.xpose.msra.mxu0 0.0
        %987 = vmatprep.subr.mxu0 0.0
        %988 = vmatpush1.xpose.msra.mxu0 0.0
        %989 = vmatprep.subr.mxu0 0.0
        %990 = vmatpush1.xpose.msra.mxu0 0.0
        %991 = vmatprep.subr.mxu0 0.0
        %992 = vmatpush1.xpose.msra.mxu0 0.0
        %993 = vmatprep.subr.mxu0 0.0
        %994 = vmatpush1.xpose.msra.mxu0 0.0
        %995 = vmatprep.mubr.f32.mxu0 0.0
        %996 = vmatmul.mubr.f32.gmra.mrb[0].mxu0 %v515
        %v997 = vpop.f32.mrb[0].mxu0
        %v998 = vadd.f32 %v916, %v997
        %v999 = vpop.f32.mrb[0].mxu0
        %1000 = vdwg.mxu0
        %v1001 = vlaneseq
        %v1002 = vshrl.u32 %v1001, 7
        %v1003 = vsub.s32 1, %v1002
        %v1004 = vrot.slane %v429, %v1003
        %v1005 = vadd.f32 %v998, %v1004
        %v1007 = vsel %vm660, %v657, 0
        %v1010 = vsel %vm660, %v423, 0
        %v1013 = vsel %vm660, %v424, 0
        %v1016 = vsel %vm660, %v425, 0
        %v1019 = vsel %vm660, %v426, 0
        %1021 = vmatprep.subr.mxu0 0.0
        %1022 = vmatpush1.xpose.msra.mxu0 %v1010
        %1023 = vmatprep.subr.mxu0 0.0
        %1024 = vmatpush1.xpose.msra.mxu0 %v1013
        %1025 = vmatprep.subr.mxu0 0.0
        %1026 = vmatpush1.xpose.msra.mxu0 %v1016
        %1027 = vmatprep.subr.mxu0 0.0
        %1028 = vmatpush1.xpose.msra.mxu0 %v1019
        %1029 = vmatprep.subr.mxu0 0.0
        %1030 = vmatpush1.xpose.msra.mxu0 0.0
        %1031 = vmatprep.subr.mxu0 0.0
        %1032 = vmatpush1.xpose.msra.mxu0 0.0
        %1033 = vmatprep.subr.mxu0 0.0
        %1034 = vmatpush1.xpose.msra.mxu0 0.0
        %1035 = vmatprep.subr.mxu0 0.0
        %1036 = vmatpush1.xpose.msra.mxu0 0.0
        %1037 = vmatprep.subr.mxu0 0.0
        %1038 = vmatpush1.xpose.msra.mxu0 0.0
        %1039 = vmatprep.subr.mxu0 0.0
        %1040 = vmatpush1.xpose.msra.mxu0 0.0
        %1041 = vmatprep.subr.mxu0 0.0
        %1042 = vmatpush1.xpose.msra.mxu0 0.0
        %1043 = vmatprep.subr.mxu0 0.0
        %1044 = vmatpush1.xpose.msra.mxu0 0.0
        %1045 = vmatprep.subr.mxu0 0.0
        %1046 = vmatpush1.xpose.msra.mxu0 0.0
        %1047 = vmatprep.subr.mxu0 0.0
        %1048 = vmatpush1.xpose.msra.mxu0 0.0
        %1049 = vmatprep.subr.mxu0 0.0
        %1050 = vmatpush1.xpose.msra.mxu0 0.0
        %1051 = vmatprep.subr.mxu0 0.0
        %1052 = vmatpush1.xpose.msra.mxu0 0.0
        %1053 = vmatprep.subr.mxu0 0.0
        %1054 = vmatpush1.xpose.msra.mxu0 0.0
        %1055 = vmatprep.subr.mxu0 0.0
        %1056 = vmatpush1.xpose.msra.mxu0 0.0
        %1057 = vmatprep.subr.mxu0 0.0
        %1058 = vmatpush1.xpose.msra.mxu0 0.0
        %1059 = vmatprep.subr.mxu0 0.0
        %1060 = vmatpush1.xpose.msra.mxu0 0.0
        %1061 = vmatprep.subr.mxu0 0.0
        %1062 = vmatpush1.xpose.msra.mxu0 0.0
        %1063 = vmatprep.subr.mxu0 0.0
        %1064 = vmatpush1.xpose.msra.mxu0 0.0
        %1065 = vmatprep.subr.mxu0 0.0
        %1066 = vmatpush1.xpose.msra.mxu0 0.0
        %1067 = vmatprep.subr.mxu0 0.0
        %1068 = vmatpush1.xpose.msra.mxu0 0.0
        %1069 = vmatprep.subr.mxu0 0.0
        %1070 = vmatpush1.xpose.msra.mxu0 0.0
        %1071 = vmatprep.subr.mxu0 0.0
        %1072 = vmatpush1.xpose.msra.mxu0 0.0
        %1073 = vmatprep.subr.mxu0 0.0
        %1074 = vmatpush1.xpose.msra.mxu0 0.0
        %1075 = vmatprep.subr.mxu0 0.0
        %1076 = vmatpush1.xpose.msra.mxu0 0.0
        %1077 = vmatprep.subr.mxu0 0.0
        %1078 = vmatpush1.xpose.msra.mxu0 0.0
        %1079 = vmatprep.subr.mxu0 0.0
        %1080 = vmatpush1.xpose.msra.mxu0 0.0
        %1081 = vmatprep.subr.mxu0 0.0
        %1082 = vmatpush1.xpose.msra.mxu0 0.0
        %1083 = vmatprep.subr.mxu0 0.0
        %1084 = vmatpush1.xpose.msra.mxu0 0.0
        %1085 = vmatprep.mubr.f32.mxu0 0.0
        %1086 = vmatmul.mubr.f32.gmra.mrb[0].mxu0 %v1007
        %v1087 = vpop.f32.mrb[0].mxu0
        %v1088 = vadd.f32 0.0, %v1087
        %v1089 = vpop.f32.mrb[0].mxu0
        %1090 = vdwg.mxu0
        %v1092 = vsel %vm434, %v411, 0
        %v1095 = vsel %vm434, %v412, 0
        %v1098 = vsel %vm434, %v413, 0
        %v1101 = vsel %vm434, %v414, 0
        %1103 = vmatprep.subr.mxu0 0.0
        %1104 = vmatpush1.xpose.msra.mxu0 %v1092
        %1105 = vmatprep.subr.mxu0 0.0
        %1106 = vmatpush1.xpose.msra.mxu0 %v1095
        %1107 = vmatprep.subr.mxu0 0.0
        %1108 = vmatpush1.xpose.msra.mxu0 %v1098
        %1109 = vmatprep.subr.mxu0 0.0
        %1110 = vmatpush1.xpose.msra.mxu0 %v1101
        %1111 = vmatprep.subr.mxu0 0.0
        %1112 = vmatpush1.xpose.msra.mxu0 0.0
        %1113 = vmatprep.subr.mxu0 0.0
        %1114 = vmatpush1.xpose.msra.mxu0 0.0
        %1115 = vmatprep.subr.mxu0 0.0
        %1116 = vmatpush1.xpose.msra.mxu0 0.0
        %1117 = vmatprep.subr.mxu0 0.0
        %1118 = vmatpush1.xpose.msra.mxu0 0.0
        %1119 = vmatprep.subr.mxu0 0.0
        %1120 = vmatpush1.xpose.msra.mxu0 0.0
        %1121 = vmatprep.subr.mxu0 0.0
        %1122 = vmatpush1.xpose.msra.mxu0 0.0
        %1123 = vmatprep.subr.mxu0 0.0
        %1124 = vmatpush1.xpose.msra.mxu0 0.0
        %1125 = vmatprep.subr.mxu0 0.0
        %1126 = vmatpush1.xpose.msra.mxu0 0.0
        %1127 = vmatprep.subr.mxu0 0.0
        %1128 = vmatpush1.xpose.msra.mxu0 0.0
        %1129 = vmatprep.subr.mxu0 0.0
        %1130 = vmatpush1.xpose.msra.mxu0 0.0
        %1131 = vmatprep.subr.mxu0 0.0
        %1132 = vmatpush1.xpose.msra.mxu0 0.0
        %1133 = vmatprep.subr.mxu0 0.0
        %1134 = vmatpush1.xpose.msra.mxu0 0.0
        %1135 = vmatprep.subr.mxu0 0.0
        %1136 = vmatpush1.xpose.msra.mxu0 0.0
        %1137 = vmatprep.subr.mxu0 0.0
        %1138 = vmatpush1.xpose.msra.mxu0 0.0
        %1139 = vmatprep.subr.mxu0 0.0
        %1140 = vmatpush1.xpose.msra.mxu0 0.0
        %1141 = vmatprep.subr.mxu0 0.0
        %1142 = vmatpush1.xpose.msra.mxu0 0.0
        %1143 = vmatprep.subr.mxu0 0.0
        %1144 = vmatpush1.xpose.msra.mxu0 0.0
        %1145 = vmatprep.subr.mxu0 0.0
        %1146 = vmatpush1.xpose.msra.mxu0 0.0
        %1147 = vmatprep.subr.mxu0 0.0
        %1148 = vmatpush1.xpose.msra.mxu0 0.0
        %1149 = vmatprep.subr.mxu0 0.0
        %1150 = vmatpush1.xpose.msra.mxu0 0.0
        %1151 = vmatprep.subr.mxu0 0.0
        %1152 = vmatpush1.xpose.msra.mxu0 0.0
        %1153 = vmatprep.subr.mxu0 0.0
        %1154 = vmatpush1.xpose.msra.mxu0 0.0
        %1155 = vmatprep.subr.mxu0 0.0
        %1156 = vmatpush1.xpose.msra.mxu0 0.0
        %1157 = vmatprep.subr.mxu0 0.0
        %1158 = vmatpush1.xpose.msra.mxu0 0.0
        %1159 = vmatprep.subr.mxu0 0.0
        %1160 = vmatpush1.xpose.msra.mxu0 0.0
        %1161 = vmatprep.subr.mxu0 0.0
        %1162 = vmatpush1.xpose.msra.mxu0 0.0
        %1163 = vmatprep.subr.mxu0 0.0
        %1164 = vmatpush1.xpose.msra.mxu0 0.0
        %1165 = vmatprep.subr.mxu0 0.0
        %1166 = vmatpush1.xpose.msra.mxu0 0.0
        %1167 = vmatprep.mubr.f32.mxu0 0.0
        %1168 = vmatmul.mubr.f32.gmra.mrb[0].mxu0 %v588
        %v1169 = vpop.f32.mrb[0].mxu0
        %v1170 = vadd.f32 %v1088, %v1169
        %v1171 = vpop.f32.mrb[0].mxu0
        %1172 = vdwg.mxu0
        %v1173 = vlaneseq
        %v1174 = vshrl.u32 %v1173, 7
        %v1175 = vsub.s32 2, %v1174
        %v1176 = vrot.slane %v429, %v1175
        %v1177 = vadd.f32 %v1170, %v1176
        %vm1178 = vcmask 64512
        %v1180 = vsel %vm1178, %v833, 0
        %v1183 = vsel %vm1178, %v1005, 0
        %1185 = vmatprep.subr.mxu0 0.0
        %1186 = vmatpush1.xpose.msra.mxu0 %v1183
        %1187 = vmatprep.subr.mxu0 0.0
        %1188 = vmatpush1.xpose.msra.mxu0 0.0
        %1189 = vmatprep.subr.mxu0 0.0
        %1190 = vmatpush1.xpose.msra.mxu0 0.0
        %1191 = vmatprep.subr.mxu0 0.0
        %1192 = vmatpush1.xpose.msra.mxu0 0.0
        %1193 = vmatprep.subr.mxu0 0.0
        %1194 = vmatpush1.xpose.msra.mxu0 0.0
        %1195 = vmatprep.subr.mxu0 0.0
        %1196 = vmatpush1.xpose.msra.mxu0 0.0
        %1197 = vmatprep.subr.mxu0 0.0
        %1198 = vmatpush1.xpose.msra.mxu0 0.0
        %1199 = vmatprep.subr.mxu0 0.0
        %1200 = vmatpush1.xpose.msra.mxu0 0.0
        %1201 = vmatprep.subr.mxu0 0.0
        %1202 = vmatpush1.xpose.msra.mxu0 0.0
        %1203 = vmatprep.subr.mxu0 0.0
        %1204 = vmatpush1.xpose.msra.mxu0 0.0
        %1205 = vmatprep.subr.mxu0 0.0
        %1206 = vmatpush1.xpose.msra.mxu0 0.0
        %1207 = vmatprep.subr.mxu0 0.0
        %1208 = vmatpush1.xpose.msra.mxu0 0.0
        %1209 = vmatprep.subr.mxu0 0.0
        %1210 = vmatpush1.xpose.msra.mxu0 0.0
        %1211 = vmatprep.subr.mxu0 0.0
        %1212 = vmatpush1.xpose.msra.mxu0 0.0
        %1213 = vmatprep.subr.mxu0 0.0
        %1214 = vmatpush1.xpose.msra.mxu0 0.0
        %1215 = vmatprep.subr.mxu0 0.0
        %1216 = vmatpush1.xpose.msra.mxu0 0.0
        %1217 = vmatprep.subr.mxu0 0.0
        %1218 = vmatpush1.xpose.msra.mxu0 0.0
        %1219 = vmatprep.subr.mxu0 0.0
        %1220 = vmatpush1.xpose.msra.mxu0 0.0
        %1221 = vmatprep.subr.mxu0 0.0
        %1222 = vmatpush1.xpose.msra.mxu0 0.0
        %1223 = vmatprep.subr.mxu0 0.0
        %1224 = vmatpush1.xpose.msra.mxu0 0.0
        %1225 = vmatprep.subr.mxu0 0.0
        %1226 = vmatpush1.xpose.msra.mxu0 0.0
        %1227 = vmatprep.subr.mxu0 0.0
        %1228 = vmatpush1.xpose.msra.mxu0 0.0
        %1229 = vmatprep.subr.mxu0 0.0
        %1230 = vmatpush1.xpose.msra.mxu0 0.0
        %1231 = vmatprep.subr.mxu0 0.0
        %1232 = vmatpush1.xpose.msra.mxu0 0.0
        %1233 = vmatprep.subr.mxu0 0.0
        %1234 = vmatpush1.xpose.msra.mxu0 0.0
        %1235 = vmatprep.subr.mxu0 0.0
        %1236 = vmatpush1.xpose.msra.mxu0 0.0
        %1237 = vmatprep.subr.mxu0 0.0
        %1238 = vmatpush1.xpose.msra.mxu0 0.0
        %1239 = vmatprep.subr.mxu0 0.0
        %1240 = vmatpush1.xpose.msra.mxu0 0.0
        %1241 = vmatprep.subr.mxu0 0.0
        %1242 = vmatpush1.xpose.msra.mxu0 0.0
        %1243 = vmatprep.subr.mxu0 0.0
        %1244 = vmatpush1.xpose.msra.mxu0 0.0
        %1245 = vmatprep.subr.mxu0 0.0
        %1246 = vmatpush1.xpose.msra.mxu0 0.0
        %1247 = vmatprep.subr.mxu0 0.0
        %1248 = vmatpush1.xpose.msra.mxu0 0.0
        %1249 = vmatprep.mubr.f32.mxu0 0.0
        %1250 = vmatmul.mubr.f32.gmra.mrb[0].mxu0 %v1180
        %v1251 = vpop.f32.mrb[0].mxu0
        %v1252 = vadd.f32 0.0, %v1251
        %v1253 = vpop.f32.mrb[0].mxu0
        %1254 = vdwg.mxu0
        %v1255 = vsel %vm1178, %v1252, -inf
        %1256 = vmax.xlane.f32.xlu0 %v1255
        %v1257 = vpop.xlane.xlu0 %1256
        %v1258 = vsub.f32 %v1252, %v1257
        %v1259 = vmul.f32 %v1258, 1.442695
        %v1260 = vpow.pop %v1259
        %v1261 = vsel %vm1178, %v1260, 0.0
        %1262 = vadd.xlane.f32.xlu0 %v1261
        %v1263 = vpop.xlane.xlu0 %1262
        %v1264 = vrcp.pop %v1263
        %v1265 = vmul.f32 %v1260, %v1264
        %v1267 = vsel %vm1178, %v1265, 0
        %1269 = vmatprep.subr.mxu0 0.0
        %1270 = vmatpush1.msra.mxu0 %v1177
        %1271 = vmatprep.subr.mxu0 0.0
        %1272 = vmatpush1.msra.mxu0 0.0
        %1273 = vmatprep.subr.mxu0 0.0
        %1274 = vmatpush1.msra.mxu0 0.0
        %1275 = vmatprep.subr.mxu0 0.0
        %1276 = vmatpush1.msra.mxu0 0.0
        %1277 = vmatprep.subr.mxu0 0.0
        %1278 = vmatpush1.msra.mxu0 0.0
        %1279 = vmatprep.subr.mxu0 0.0
        %1280 = vmatpush1.msra.mxu0 0.0
        %1281 = vmatprep.subr.mxu0 0.0
        %1282 = vmatpush1.msra.mxu0 0.0
        %1283 = vmatprep.subr.mxu0 0.0
        %1284 = vmatpush1.msra.mxu0 0.0
        %1285 = vmatprep.subr.mxu0 0.0
        %1286 = vmatpush1.msra.mxu0 0.0
        %1287 = vmatprep.subr.mxu0 0.0
        %1288 = vmatpush1.msra.mxu0 0.0
        %1289 = vmatprep.subr.mxu0 0.0
        %1290 = vmatpush1.msra.mxu0 0.0
        %1291 = vmatprep.subr.mxu0 0.0
        %1292 = vmatpush1.msra.mxu0 0.0
        %1293 = vmatprep.subr.mxu0 0.0
        %1294 = vmatpush1.msra.mxu0 0.0
        %1295 = vmatprep.subr.mxu0 0.0
        %1296 = vmatpush1.msra.mxu0 0.0
        %1297 = vmatprep.subr.mxu0 0.0
        %1298 = vmatpush1.msra.mxu0 0.0
        %1299 = vmatprep.subr.mxu0 0.0
        %1300 = vmatpush1.msra.mxu0 0.0
        %1301 = vmatprep.subr.mxu0 0.0
        %1302 = vmatpush1.msra.mxu0 0.0
        %1303 = vmatprep.subr.mxu0 0.0
        %1304 = vmatpush1.msra.mxu0 0.0
        %1305 = vmatprep.subr.mxu0 0.0
        %1306 = vmatpush1.msra.mxu0 0.0
        %1307 = vmatprep.subr.mxu0 0.0
        %1308 = vmatpush1.msra.mxu0 0.0
        %1309 = vmatprep.subr.mxu0 0.0
        %1310 = vmatpush1.msra.mxu0 0.0
        %1311 = vmatprep.subr.mxu0 0.0
        %1312 = vmatpush1.msra.mxu0 0.0
        %1313 = vmatprep.subr.mxu0 0.0
        %1314 = vmatpush1.msra.mxu0 0.0
        %1315 = vmatprep.subr.mxu0 0.0
        %1316 = vmatpush1.msra.mxu0 0.0
        %1317 = vmatprep.subr.mxu0 0.0
        %1318 = vmatpush1.msra.mxu0 0.0
        %1319 = vmatprep.subr.mxu0 0.0
        %1320 = vmatpush1.msra.mxu0 0.0
        %1321 = vmatprep.subr.mxu0 0.0
        %1322 = vmatpush1.msra.mxu0 0.0
        %1323 = vmatprep.subr.mxu0 0.0
        %1324 = vmatpush1.msra.mxu0 0.0
        %1325 = vmatprep.subr.mxu0 0.0
        %1326 = vmatpush1.msra.mxu0 0.0
        %1327 = vmatprep.subr.mxu0 0.0
        %1328 = vmatpush1.msra.mxu0 0.0
        %1329 = vmatprep.subr.mxu0 0.0
        %1330 = vmatpush1.msra.mxu0 0.0
        %1331 = vmatprep.subr.mxu0 0.0
        %1332 = vmatpush1.msra.mxu0 0.0
        %1333 = vmatprep.mubr.f32.mxu0 0.0
        %1334 = vmatmul.mubr.f32.gmra.mrb[0].mxu0 %v1267
        %v1335 = vpop.f32.mrb[0].mxu0
        %v1336 = vadd.f32 0.0, %v1335
        %v1337 = vpop.f32.mrb[0].mxu0
        %1338 = vdwg.mxu0
        %1339 = vrot.lane.b32.xlu0 %v833, 120
        %v1340 = vpop.permute.xlu0 %1339
        %1341 = vrot.lane.b32.xlu0 %v1005, 120
        %v1342 = vpop.permute.xlu0 %1341
        %v1343 = vsel %vm1178, %v1340, 0
        %v1345 = vsel %vm1178, %v1342, 0
        %1347 = vmatprep.subr.mxu0 0.0
        %1348 = vmatpush1.xpose.msra.mxu0 %v1345
        %1349 = vmatprep.subr.mxu0 0.0
        %1350 = vmatpush1.xpose.msra.mxu0 0.0
        %1351 = vmatprep.subr.mxu0 0.0
        %1352 = vmatpush1.xpose.msra.mxu0 0.0
        %1353 = vmatprep.subr.mxu0 0.0
        %1354 = vmatpush1.xpose.msra.mxu0 0.0
        %1355 = vmatprep.subr.mxu0 0.0
        %1356 = vmatpush1.xpose.msra.mxu0 0.0
        %1357 = vmatprep.subr.mxu0 0.0
        %1358 = vmatpush1.xpose.msra.mxu0 0.0
        %1359 = vmatprep.subr.mxu0 0.0
        %1360 = vmatpush1.xpose.msra.mxu0 0.0
        %1361 = vmatprep.subr.mxu0 0.0
        %1362 = vmatpush1.xpose.msra.mxu0 0.0
        %1363 = vmatprep.subr.mxu0 0.0
        %1364 = vmatpush1.xpose.msra.mxu0 0.0
        %1365 = vmatprep.subr.mxu0 0.0
        %1366 = vmatpush1.xpose.msra.mxu0 0.0
        %1367 = vmatprep.subr.mxu0 0.0
        %1368 = vmatpush1.xpose.msra.mxu0 0.0
        %1369 = vmatprep.subr.mxu0 0.0
        %1370 = vmatpush1.xpose.msra.mxu0 0.0
        %1371 = vmatprep.subr.mxu0 0.0
        %1372 = vmatpush1.xpose.msra.mxu0 0.0
        %1373 = vmatprep.subr.mxu0 0.0
        %1374 = vmatpush1.xpose.msra.mxu0 0.0
        %1375 = vmatprep.subr.mxu0 0.0
        %1376 = vmatpush1.xpose.msra.mxu0 0.0
        %1377 = vmatprep.subr.mxu0 0.0
        %1378 = vmatpush1.xpose.msra.mxu0 0.0
        %1379 = vmatprep.subr.mxu0 0.0
        %1380 = vmatpush1.xpose.msra.mxu0 0.0
        %1381 = vmatprep.subr.mxu0 0.0
        %1382 = vmatpush1.xpose.msra.mxu0 0.0
        %1383 = vmatprep.subr.mxu0 0.0
        %1384 = vmatpush1.xpose.msra.mxu0 0.0
        %1385 = vmatprep.subr.mxu0 0.0
        %1386 = vmatpush1.xpose.msra.mxu0 0.0
        %1387 = vmatprep.subr.mxu0 0.0
        %1388 = vmatpush1.xpose.msra.mxu0 0.0
        %1389 = vmatprep.subr.mxu0 0.0
        %1390 = vmatpush1.xpose.msra.mxu0 0.0
        %1391 = vmatprep.subr.mxu0 0.0
        %1392 = vmatpush1.xpose.msra.mxu0 0.0
        %1393 = vmatprep.subr.mxu0 0.0
        %1394 = vmatpush1.xpose.msra.mxu0 0.0
        %1395 = vmatprep.subr.mxu0 0.0
        %1396 = vmatpush1.xpose.msra.mxu0 0.0
        %1397 = vmatprep.subr.mxu0 0.0
        %1398 = vmatpush1.xpose.msra.mxu0 0.0
        %1399 = vmatprep.subr.mxu0 0.0
        %1400 = vmatpush1.xpose.msra.mxu0 0.0
        %1401 = vmatprep.subr.mxu0 0.0
        %1402 = vmatpush1.xpose.msra.mxu0 0.0
        %1403 = vmatprep.subr.mxu0 0.0
        %1404 = vmatpush1.xpose.msra.mxu0 0.0
        %1405 = vmatprep.subr.mxu0 0.0
        %1406 = vmatpush1.xpose.msra.mxu0 0.0
        %1407 = vmatprep.subr.mxu0 0.0
        %1408 = vmatpush1.xpose.msra.mxu0 0.0
        %1409 = vmatprep.subr.mxu0 0.0
        %1410 = vmatpush1.xpose.msra.mxu0 0.0
        %1411 = vmatprep.mubr.f32.mxu0 0.0
        %1412 = vmatmul.mubr.f32.gmra.mrb[0].mxu0 %v1343
        %v1413 = vpop.f32.mrb[0].mxu0
        %v1414 = vadd.f32 0.0, %v1413
        %v1415 = vpop.f32.mrb[0].mxu0
        %1416 = vdwg.mxu0
        %v1417 = vsel %vm1178, %v1414, -inf
        %1418 = vmax.xlane.f32.xlu0 %v1417
        %v1419 = vpop.xlane.xlu0 %1418
        %v1420 = vsub.f32 %v1414, %v1419
        %v1421 = vmul.f32 %v1420, 1.442695
        %v1422 = vpow.pop %v1421
        %v1423 = vsel %vm1178, %v1422, 0.0
        %1424 = vadd.xlane.f32.xlu0 %v1423
        %v1425 = vpop.xlane.xlu0 %1424
        %v1426 = vrcp.pop %v1425
        %v1427 = vmul.f32 %v1422, %v1426
        %v1428 = vadd.f32 %v1265, %v1427
        %1430 = vrot.lane.b32.xlu0 %v1177, 120
        %v1431 = vpop.permute.xlu0 %1430
        %v1434 = vsel %vm1178, %v1427, 0
        %1436 = vmatprep.subr.mxu0 0.0
        %1437 = vmatpush1.msra.mxu0 %v1431
        %1438 = vmatprep.subr.mxu0 0.0
        %1439 = vmatpush1.msra.mxu0 0.0
        %1440 = vmatprep.subr.mxu0 0.0
        %1441 = vmatpush1.msra.mxu0 0.0
        %1442 = vmatprep.subr.mxu0 0.0
        %1443 = vmatpush1.msra.mxu0 0.0
        %1444 = vmatprep.subr.mxu0 0.0
        %1445 = vmatpush1.msra.mxu0 0.0
        %1446 = vmatprep.subr.mxu0 0.0
        %1447 = vmatpush1.msra.mxu0 0.0
        %1448 = vmatprep.subr.mxu0 0.0
        %1449 = vmatpush1.msra.mxu0 0.0
        %1450 = vmatprep.subr.mxu0 0.0
        %1451 = vmatpush1.msra.mxu0 0.0
        %1452 = vmatprep.subr.mxu0 0.0
        %1453 = vmatpush1.msra.mxu0 0.0
        %1454 = vmatprep.subr.mxu0 0.0
        %1455 = vmatpush1.msra.mxu0 0.0
        %1456 = vmatprep.subr.mxu0 0.0
        %1457 = vmatpush1.msra.mxu0 0.0
        %1458 = vmatprep.subr.mxu0 0.0
        %1459 = vmatpush1.msra.mxu0 0.0
        %1460 = vmatprep.subr.mxu0 0.0
        %1461 = vmatpush1.msra.mxu0 0.0
        %1462 = vmatprep.subr.mxu0 0.0
        %1463 = vmatpush1.msra.mxu0 0.0
        %1464 = vmatprep.subr.mxu0 0.0
        %1465 = vmatpush1.msra.mxu0 0.0
        %1466 = vmatprep.subr.mxu0 0.0
        %1467 = vmatpush1.msra.mxu0 0.0
        %1468 = vmatprep.subr.mxu0 0.0
        %1469 = vmatpush1.msra.mxu0 0.0
        %1470 = vmatprep.subr.mxu0 0.0
        %1471 = vmatpush1.msra.mxu0 0.0
        %1472 = vmatprep.subr.mxu0 0.0
        %1473 = vmatpush1.msra.mxu0 0.0
        %1474 = vmatprep.subr.mxu0 0.0
        %1475 = vmatpush1.msra.mxu0 0.0
        %1476 = vmatprep.subr.mxu0 0.0
        %1477 = vmatpush1.msra.mxu0 0.0
        %1478 = vmatprep.subr.mxu0 0.0
        %1479 = vmatpush1.msra.mxu0 0.0
        %1480 = vmatprep.subr.mxu0 0.0
        %1481 = vmatpush1.msra.mxu0 0.0
        %1482 = vmatprep.subr.mxu0 0.0
        %1483 = vmatpush1.msra.mxu0 0.0
        %1484 = vmatprep.subr.mxu0 0.0
        %1485 = vmatpush1.msra.mxu0 0.0
        %1486 = vmatprep.subr.mxu0 0.0
        %1487 = vmatpush1.msra.mxu0 0.0
        %1488 = vmatprep.subr.mxu0 0.0
        %1489 = vmatpush1.msra.mxu0 0.0
        %1490 = vmatprep.subr.mxu0 0.0
        %1491 = vmatpush1.msra.mxu0 0.0
        %1492 = vmatprep.subr.mxu0 0.0
        %1493 = vmatpush1.msra.mxu0 0.0
        %1494 = vmatprep.subr.mxu0 0.0
        %1495 = vmatpush1.msra.mxu0 0.0
        %1496 = vmatprep.subr.mxu0 0.0
        %1497 = vmatpush1.msra.mxu0 0.0
        %1498 = vmatprep.subr.mxu0 0.0
        %1499 = vmatpush1.msra.mxu0 0.0
        %1500 = vmatprep.mubr.f32.mxu0 0.0
        %1501 = vmatmul.mubr.f32.gmra.mrb[0].mxu0 %v1434
        %v1502 = vpop.f32.mrb[0].mxu0
        %v1503 = vadd.f32 0.0, %v1502
        %v1504 = vpop.f32.mrb[0].mxu0
        %1505 = vdwg.mxu0
        %1506 = vrot.lane.b32.xlu0 %v833, 112
        %v1507 = vpop.permute.xlu0 %1506
        %1508 = vrot.lane.b32.xlu0 %v1005, 112
        %v1509 = vpop.permute.xlu0 %1508
        %v1510 = vsel %vm1178, %v1507, 0
        %v1512 = vsel %vm1178, %v1509, 0
        %1514 = vmatprep.subr.mxu0 0.0
        %1515 = vmatpush1.xpose.msra.mxu0 %v1512
        %1516 = vmatprep.subr.mxu0 0.0
        %1517 = vmatpush1.xpose.msra.mxu0 0.0
        %1518 = vmatprep.subr.mxu0 0.0
        %1519 = vmatpush1.xpose.msra.mxu0 0.0
        %1520 = vmatprep.subr.mxu0 0.0
        %1521 = vmatpush1.xpose.msra.mxu0 0.0
        %1522 = vmatprep.subr.mxu0 0.0
        %1523 = vmatpush1.xpose.msra.mxu0 0.0
        %1524 = vmatprep.subr.mxu0 0.0
        %1525 = vmatpush1.xpose.msra.mxu0 0.0
        %1526 = vmatprep.subr.mxu0 0.0
        %1527 = vmatpush1.xpose.msra.mxu0 0.0
        %1528 = vmatprep.subr.mxu0 0.0
        %1529 = vmatpush1.xpose.msra.mxu0 0.0
        %1530 = vmatprep.subr.mxu0 0.0
        %1531 = vmatpush1.xpose.msra.mxu0 0.0
        %1532 = vmatprep.subr.mxu0 0.0
        %1533 = vmatpush1.xpose.msra.mxu0 0.0
        %1534 = vmatprep.subr.mxu0 0.0
        %1535 = vmatpush1.xpose.msra.mxu0 0.0
        %1536 = vmatprep.subr.mxu0 0.0
        %1537 = vmatpush1.xpose.msra.mxu0 0.0
        %1538 = vmatprep.subr.mxu0 0.0
        %1539 = vmatpush1.xpose.msra.mxu0 0.0
        %1540 = vmatprep.subr.mxu0 0.0
        %1541 = vmatpush1.xpose.msra.mxu0 0.0
        %1542 = vmatprep.subr.mxu0 0.0
        %1543 = vmatpush1.xpose.msra.mxu0 0.0
        %1544 = vmatprep.subr.mxu0 0.0
        %1545 = vmatpush1.xpose.msra.mxu0 0.0
        %1546 = vmatprep.subr.mxu0 0.0
        %1547 = vmatpush1.xpose.msra.mxu0 0.0
        %1548 = vmatprep.subr.mxu0 0.0
        %1549 = vmatpush1.xpose.msra.mxu0 0.0
        %1550 = vmatprep.subr.mxu0 0.0
        %1551 = vmatpush1.xpose.msra.mxu0 0.0
        %1552 = vmatprep.subr.mxu0 0.0
        %1553 = vmatpush1.xpose.msra.mxu0 0.0
        %1554 = vmatprep.subr.mxu0 0.0
        %1555 = vmatpush1.xpose.msra.mxu0 0.0
        %1556 = vmatprep.subr.mxu0 0.0
        %1557 = vmatpush1.xpose.msra.mxu0 0.0
        %1558 = vmatprep.subr.mxu0 0.0
        %1559 = vmatpush1.xpose.msra.mxu0 0.0
        %1560 = vmatprep.subr.mxu0 0.0
        %1561 = vmatpush1.xpose.msra.mxu0 0.0
        %1562 = vmatprep.subr.mxu0 0.0
        %1563 = vmatpush1.xpose.msra.mxu0 0.0
        %1564 = vmatprep.subr.mxu0 0.0
        %1565 = vmatpush1.xpose.msra.mxu0 0.0
        %1566 = vmatprep.subr.mxu0 0.0
        %1567 = vmatpush1.xpose.msra.mxu0 0.0
        %1568 = vmatprep.subr.mxu0 0.0
        %1569 = vmatpush1.xpose.msra.mxu0 0.0
        %1570 = vmatprep.subr.mxu0 0.0
        %1571 = vmatpush1.xpose.msra.mxu0 0.0
        %1572 = vmatprep.subr.mxu0 0.0
        %1573 = vmatpush1.xpose.msra.mxu0 0.0
        %1574 = vmatprep.subr.mxu0 0.0
        %1575 = vmatpush1.xpose.msra.mxu0 0.0
        %1576 = vmatprep.subr.mxu0 0.0
        %1577 = vmatpush1.xpose.msra.mxu0 0.0
        %1578 = vmatprep.mubr.f32.mxu0 0.0
        %1579 = vmatmul.mubr.f32.gmra.mrb[0].mxu0 %v1510
        %v1580 = vpop.f32.mrb[0].mxu0
        %v1581 = vadd.f32 0.0, %v1580
        %v1582 = vpop.f32.mrb[0].mxu0
        %1583 = vdwg.mxu0
        %v1584 = vsel %vm1178, %v1581, -inf
        %1585 = vmax.xlane.f32.xlu0 %v1584
        %v1586 = vpop.xlane.xlu0 %1585
        %v1587 = vsub.f32 %v1581, %v1586
        %v1588 = vmul.f32 %v1587, 1.442695
        %v1589 = vpow.pop %v1588
        %v1590 = vsel %vm1178, %v1589, 0.0
        %1591 = vadd.xlane.f32.xlu0 %v1590
        %v1592 = vpop.xlane.xlu0 %1591
        %v1593 = vrcp.pop %v1592
        %v1594 = vmul.f32 %v1589, %v1593
        %v1595 = vadd.f32 %v1428, %v1594
        %1596 = vrot.lane.b32.xlu0 %v1177, 112
        %v1597 = vpop.permute.xlu0 %1596
        %v1600 = vsel %vm1178, %v1594, 0
        %1602 = vmatprep.subr.mxu0 0.0
        %1603 = vmatpush1.msra.mxu0 %v1597
        %1604 = vmatprep.subr.mxu0 0.0
        %1605 = vmatpush1.msra.mxu0 0.0
        %1606 = vmatprep.subr.mxu0 0.0
        %1607 = vmatpush1.msra.mxu0 0.0
        %1608 = vmatprep.subr.mxu0 0.0
        %1609 = vmatpush1.msra.mxu0 0.0
        %1610 = vmatprep.subr.mxu0 0.0
        %1611 = vmatpush1.msra.mxu0 0.0
        %1612 = vmatprep.subr.mxu0 0.0
        %1613 = vmatpush1.msra.mxu0 0.0
        %1614 = vmatprep.subr.mxu0 0.0
        %1615 = vmatpush1.msra.mxu0 0.0
        %1616 = vmatprep.subr.mxu0 0.0
        %1617 = vmatpush1.msra.mxu0 0.0
        %1618 = vmatprep.subr.mxu0 0.0
        %1619 = vmatpush1.msra.mxu0 0.0
        %1620 = vmatprep.subr.mxu0 0.0
        %1621 = vmatpush1.msra.mxu0 0.0
        %1622 = vmatprep.subr.mxu0 0.0
        %1623 = vmatpush1.msra.mxu0 0.0
        %1624 = vmatprep.subr.mxu0 0.0
        %1625 = vmatpush1.msra.mxu0 0.0
        %1626 = vmatprep.subr.mxu0 0.0
        %1627 = vmatpush1.msra.mxu0 0.0
        %1628 = vmatprep.subr.mxu0 0.0
        %1629 = vmatpush1.msra.mxu0 0.0
        %1630 = vmatprep.subr.mxu0 0.0
        %1631 = vmatpush1.msra.mxu0 0.0
        %1632 = vmatprep.subr.mxu0 0.0
        %1633 = vmatpush1.msra.mxu0 0.0
        %1634 = vmatprep.subr.mxu0 0.0
        %1635 = vmatpush1.msra.mxu0 0.0
        %1636 = vmatprep.subr.mxu0 0.0
        %1637 = vmatpush1.msra.mxu0 0.0
        %1638 = vmatprep.subr.mxu0 0.0
        %1639 = vmatpush1.msra.mxu0 0.0
        %1640 = vmatprep.subr.mxu0 0.0
        %1641 = vmatpush1.msra.mxu0 0.0
        %1642 = vmatprep.subr.mxu0 0.0
        %1643 = vmatpush1.msra.mxu0 0.0
        %1644 = vmatprep.subr.mxu0 0.0
        %1645 = vmatpush1.msra.mxu0 0.0
        %1646 = vmatprep.subr.mxu0 0.0
        %1647 = vmatpush1.msra.mxu0 0.0
        %1648 = vmatprep.subr.mxu0 0.0
        %1649 = vmatpush1.msra.mxu0 0.0
        %1650 = vmatprep.subr.mxu0 0.0
        %1651 = vmatpush1.msra.mxu0 0.0
        %1652 = vmatprep.subr.mxu0 0.0
        %1653 = vmatpush1.msra.mxu0 0.0
        %1654 = vmatprep.subr.mxu0 0.0
        %1655 = vmatpush1.msra.mxu0 0.0
        %1656 = vmatprep.subr.mxu0 0.0
        %1657 = vmatpush1.msra.mxu0 0.0
        %1658 = vmatprep.subr.mxu0 0.0
        %1659 = vmatpush1.msra.mxu0 0.0
        %1660 = vmatprep.subr.mxu0 0.0
        %1661 = vmatpush1.msra.mxu0 0.0
        %1662 = vmatprep.subr.mxu0 0.0
        %1663 = vmatpush1.msra.mxu0 0.0
        %1664 = vmatprep.subr.mxu0 0.0
        %1665 = vmatpush1.msra.mxu0 0.0
        %1666 = vmatprep.mubr.f32.mxu0 0.0
        %1667 = vmatmul.mubr.f32.gmra.mrb[0].mxu0 %v1600
        %v1668 = vpop.f32.mrb[0].mxu0
        %v1669 = vadd.f32 0.0, %v1668
        %v1670 = vpop.f32.mrb[0].mxu0
        %1671 = vdwg.mxu0
        %1672 = vrot.lane.b32.xlu0 %v833, 104
        %v1673 = vpop.permute.xlu0 %1672
        %1674 = vrot.lane.b32.xlu0 %v1005, 104
        %v1675 = vpop.permute.xlu0 %1674
        %v1676 = vsel %vm1178, %v1673, 0
        %v1678 = vsel %vm1178, %v1675, 0
        %1680 = vmatprep.subr.mxu0 0.0
        %1681 = vmatpush1.xpose.msra.mxu0 %v1678
        %1682 = vmatprep.subr.mxu0 0.0
        %1683 = vmatpush1.xpose.msra.mxu0 0.0
        %1684 = vmatprep.subr.mxu0 0.0
        %1685 = vmatpush1.xpose.msra.mxu0 0.0
        %1686 = vmatprep.subr.mxu0 0.0
        %1687 = vmatpush1.xpose.msra.mxu0 0.0
        %1688 = vmatprep.subr.mxu0 0.0
        %1689 = vmatpush1.xpose.msra.mxu0 0.0
        %1690 = vmatprep.subr.mxu0 0.0
        %1691 = vmatpush1.xpose.msra.mxu0 0.0
        %1692 = vmatprep.subr.mxu0 0.0
        %1693 = vmatpush1.xpose.msra.mxu0 0.0
        %1694 = vmatprep.subr.mxu0 0.0
        %1695 = vmatpush1.xpose.msra.mxu0 0.0
        %1696 = vmatprep.subr.mxu0 0.0
        %1697 = vmatpush1.xpose.msra.mxu0 0.0
        %1698 = vmatprep.subr.mxu0 0.0
        %1699 = vmatpush1.xpose.msra.mxu0 0.0
        %1700 = vmatprep.subr.mxu0 0.0
        %1701 = vmatpush1.xpose.msra.mxu0 0.0
        %1702 = vmatprep.subr.mxu0 0.0
        %1703 = vmatpush1.xpose.msra.mxu0 0.0
        %1704 = vmatprep.subr.mxu0 0.0
        %1705 = vmatpush1.xpose.msra.mxu0 0.0
        %1706 = vmatprep.subr.mxu0 0.0
        %1707 = vmatpush1.xpose.msra.mxu0 0.0
        %1708 = vmatprep.subr.mxu0 0.0
        %1709 = vmatpush1.xpose.msra.mxu0 0.0
        %1710 = vmatprep.subr.mxu0 0.0
        %1711 = vmatpush1.xpose.msra.mxu0 0.0
        %1712 = vmatprep.subr.mxu0 0.0
        %1713 = vmatpush1.xpose.msra.mxu0 0.0
        %1714 = vmatprep.subr.mxu0 0.0
        %1715 = vmatpush1.xpose.msra.mxu0 0.0
        %1716 = vmatprep.subr.mxu0 0.0
        %1717 = vmatpush1.xpose.msra.mxu0 0.0
        %1718 = vmatprep.subr.mxu0 0.0
        %1719 = vmatpush1.xpose.msra.mxu0 0.0
        %1720 = vmatprep.subr.mxu0 0.0
        %1721 = vmatpush1.xpose.msra.mxu0 0.0
        %1722 = vmatprep.subr.mxu0 0.0
        %1723 = vmatpush1.xpose.msra.mxu0 0.0
        %1724 = vmatprep.subr.mxu0 0.0
        %1725 = vmatpush1.xpose.msra.mxu0 0.0
        %1726 = vmatprep.subr.mxu0 0.0
        %1727 = vmatpush1.xpose.msra.mxu0 0.0
        %1728 = vmatprep.subr.mxu0 0.0
        %1729 = vmatpush1.xpose.msra.mxu0 0.0
        %1730 = vmatprep.subr.mxu0 0.0
        %1731 = vmatpush1.xpose.msra.mxu0 0.0
        %1732 = vmatprep.subr.mxu0 0.0
        %1733 = vmatpush1.xpose.msra.mxu0 0.0
        %1734 = vmatprep.subr.mxu0 0.0
        %1735 = vmatpush1.xpose.msra.mxu0 0.0
        %1736 = vmatprep.subr.mxu0 0.0
        %1737 = vmatpush1.xpose.msra.mxu0 0.0
        %1738 = vmatprep.subr.mxu0 0.0
        %1739 = vmatpush1.xpose.msra.mxu0 0.0
        %1740 = vmatprep.subr.mxu0 0.0
        %1741 = vmatpush1.xpose.msra.mxu0 0.0
        %1742 = vmatprep.subr.mxu0 0.0
        %1743 = vmatpush1.xpose.msra.mxu0 0.0
        %1744 = vmatprep.mubr.f32.mxu0 0.0
        %1745 = vmatmul.mubr.f32.gmra.mrb[0].mxu0 %v1676
        %v1746 = vpop.f32.mrb[0].mxu0
        %v1747 = vadd.f32 0.0, %v1746
        %v1748 = vpop.f32.mrb[0].mxu0
        %1749 = vdwg.mxu0
        %v1750 = vsel %vm1178, %v1747, -inf
        %1751 = vmax.xlane.f32.xlu0 %v1750
        %v1752 = vpop.xlane.xlu0 %1751
        %v1753 = vsub.f32 %v1747, %v1752
        %v1754 = vmul.f32 %v1753, 1.442695
        %v1755 = vpow.pop %v1754
        %v1756 = vsel %vm1178, %v1755, 0.0
        %1757 = vadd.xlane.f32.xlu0 %v1756
        %v1758 = vpop.xlane.xlu0 %1757
        %v1759 = vrcp.pop %v1758
        %v1760 = vmul.f32 %v1755, %v1759
        %v1761 = vadd.f32 %v1595, %v1760
        %1762 = vrot.lane.b32.xlu0 %v1177, 104
        %v1763 = vpop.permute.xlu0 %1762
        %v1766 = vsel %vm1178, %v1760, 0
        %1768 = vmatprep.subr.mxu0 0.0
        %1769 = vmatpush1.msra.mxu0 %v1763
        %1770 = vmatprep.subr.mxu0 0.0
        %1771 = vmatpush1.msra.mxu0 0.0
        %1772 = vmatprep.subr.mxu0 0.0
        %1773 = vmatpush1.msra.mxu0 0.0
        %1774 = vmatprep.subr.mxu0 0.0
        %1775 = vmatpush1.msra.mxu0 0.0
        %1776 = vmatprep.subr.mxu0 0.0
        %1777 = vmatpush1.msra.mxu0 0.0
        %1778 = vmatprep.subr.mxu0 0.0
        %1779 = vmatpush1.msra.mxu0 0.0
        %1780 = vmatprep.subr.mxu0 0.0
        %1781 = vmatpush1.msra.mxu0 0.0
        %1782 = vmatprep.subr.mxu0 0.0
        %1783 = vmatpush1.msra.mxu0 0.0
        %1784 = vmatprep.subr.mxu0 0.0
        %1785 = vmatpush1.msra.mxu0 0.0
        %1786 = vmatprep.subr.mxu0 0.0
        %1787 = vmatpush1.msra.mxu0 0.0
        %1788 = vmatprep.subr.mxu0 0.0
        %1789 = vmatpush1.msra.mxu0 0.0
        %1790 = vmatprep.subr.mxu0 0.0
        %1791 = vmatpush1.msra.mxu0 0.0
        %1792 = vmatprep.subr.mxu0 0.0
        %1793 = vmatpush1.msra.mxu0 0.0
        %1794 = vmatprep.subr.mxu0 0.0
        %1795 = vmatpush1.msra.mxu0 0.0
        %1796 = vmatprep.subr.mxu0 0.0
        %1797 = vmatpush1.msra.mxu0 0.0
        %1798 = vmatprep.subr.mxu0 0.0
        %1799 = vmatpush1.msra.mxu0 0.0
        %1800 = vmatprep.subr.mxu0 0.0
        %1801 = vmatpush1.msra.mxu0 0.0
        %1802 = vmatprep.subr.mxu0 0.0
        %1803 = vmatpush1.msra.mxu0 0.0
        %1804 = vmatprep.subr.mxu0 0.0
        %1805 = vmatpush1.msra.mxu0 0.0
        %1806 = vmatprep.subr.mxu0 0.0
        %1807 = vmatpush1.msra.mxu0 0.0
        %1808 = vmatprep.subr.mxu0 0.0
        %1809 = vmatpush1.msra.mxu0 0.0
        %1810 = vmatprep.subr.mxu0 0.0
        %1811 = vmatpush1.msra.mxu0 0.0
        %1812 = vmatprep.subr.mxu0 0.0
        %1813 = vmatpush1.msra.mxu0 0.0
        %1814 = vmatprep.subr.mxu0 0.0
        %1815 = vmatpush1.msra.mxu0 0.0
        %1816 = vmatprep.subr.mxu0 0.0
        %1817 = vmatpush1.msra.mxu0 0.0
        %1818 = vmatprep.subr.mxu0 0.0
        %1819 = vmatpush1.msra.mxu0 0.0
        %1820 = vmatprep.subr.mxu0 0.0
        %1821 = vmatpush1.msra.mxu0 0.0
        %1822 = vmatprep.subr.mxu0 0.0
        %1823 = vmatpush1.msra.mxu0 0.0
        %1824 = vmatprep.subr.mxu0 0.0
        %1825 = vmatpush1.msra.mxu0 0.0
        %1826 = vmatprep.subr.mxu0 0.0
        %1827 = vmatpush1.msra.mxu0 0.0
        %1828 = vmatprep.subr.mxu0 0.0
        %1829 = vmatpush1.msra.mxu0 0.0
        %1830 = vmatprep.subr.mxu0 0.0
        %1831 = vmatpush1.msra.mxu0 0.0
        %1832 = vmatprep.mubr.f32.mxu0 0.0
        %1833 = vmatmul.mubr.f32.gmra.mrb[0].mxu0 %v1766
        %v1834 = vpop.f32.mrb[0].mxu0
        %v1835 = vadd.f32 0.0, %v1834
        %v1836 = vpop.f32.mrb[0].mxu0
        %1837 = vdwg.mxu0
        %1839 = vrot.lane.b32.xlu0 %v1503, 8
        %v1840 = vpop.permute.xlu0 %1839
        %1843 = vrot.lane.b32.xlu0 %v1669, 16
        %v1844 = vpop.permute.xlu0 %1843
        %1847 = vrot.lane.b32.xlu0 %v1835, 24
        %v1848 = vpop.permute.xlu0 %1847
        %v1850 = vsel %vm1178, %v1336, %v1840
        %v1851 = vsel %vm660, %v1850, %v1844
        %vm1852 = vcmask 195584
        %v1853 = vsel %vm1852, %v1851, %v1848
        %v1854 = vld [vmem:[%s8] sm:$0x1]
        %v1856 = vlaneseq
        %v1857 = vshrl.u32 %v1856, 7
        %v1858 = vsub.s32 0, %v1857
        %v1859 = vrot.slane %v1854, %v1858
        %v1862 = vsel %vm434, %v1853, 0
        %1864 = vmatprep.subr.mxu0 0.0
        %1865 = vmatpush1.msra.mxu0 %v430
        %1866 = vmatprep.subr.mxu0 0.0
        %1867 = vmatpush1.msra.mxu0 %v431
        %1868 = vmatprep.subr.mxu0 0.0
        %1869 = vmatpush1.msra.mxu0 %v432
        %1870 = vmatprep.subr.mxu0 0.0
        %1871 = vmatpush1.msra.mxu0 %v433
        %1872 = vmatprep.subr.mxu0 0.0
        %1873 = vmatpush1.msra.mxu0 0.0
        %1874 = vmatprep.subr.mxu0 0.0
        %1875 = vmatpush1.msra.mxu0 0.0
        %1876 = vmatprep.subr.mxu0 0.0
        %1877 = vmatpush1.msra.mxu0 0.0
        %1878 = vmatprep.subr.mxu0 0.0
        %1879 = vmatpush1.msra.mxu0 0.0
        %1880 = vmatprep.subr.mxu0 0.0
        %1881 = vmatpush1.msra.mxu0 0.0
        %1882 = vmatprep.subr.mxu0 0.0
        %1883 = vmatpush1.msra.mxu0 0.0
        %1884 = vmatprep.subr.mxu0 0.0
        %1885 = vmatpush1.msra.mxu0 0.0
        %1886 = vmatprep.subr.mxu0 0.0
        %1887 = vmatpush1.msra.mxu0 0.0
        %1888 = vmatprep.subr.mxu0 0.0
        %1889 = vmatpush1.msra.mxu0 0.0
        %1890 = vmatprep.subr.mxu0 0.0
        %1891 = vmatpush1.msra.mxu0 0.0
        %1892 = vmatprep.subr.mxu0 0.0
        %1893 = vmatpush1.msra.mxu0 0.0
        %1894 = vmatprep.subr.mxu0 0.0
        %1895 = vmatpush1.msra.mxu0 0.0
        %1896 = vmatprep.subr.mxu0 0.0
        %1897 = vmatpush1.msra.mxu0 0.0
        %1898 = vmatprep.subr.mxu0 0.0
        %1899 = vmatpush1.msra.mxu0 0.0
        %1900 = vmatprep.subr.mxu0 0.0
        %1901 = vmatpush1.msra.mxu0 0.0
        %1902 = vmatprep.subr.mxu0 0.0
        %1903 = vmatpush1.msra.mxu0 0.0
        %1904 = vmatprep.subr.mxu0 0.0
        %1905 = vmatpush1.msra.mxu0 0.0
        %1906 = vmatprep.subr.mxu0 0.0
        %1907 = vmatpush1.msra.mxu0 0.0
        %1908 = vmatprep.subr.mxu0 0.0
        %1909 = vmatpush1.msra.mxu0 0.0
        %1910 = vmatprep.subr.mxu0 0.0
        %1911 = vmatpush1.msra.mxu0 0.0
        %1912 = vmatprep.subr.mxu0 0.0
        %1913 = vmatpush1.msra.mxu0 0.0
        %1914 = vmatprep.subr.mxu0 0.0
        %1915 = vmatpush1.msra.mxu0 0.0
        %1916 = vmatprep.subr.mxu0 0.0
        %1917 = vmatpush1.msra.mxu0 0.0
        %1918 = vmatprep.subr.mxu0 0.0
        %1919 = vmatpush1.msra.mxu0 0.0
        %1920 = vmatprep.subr.mxu0 0.0
        %1921 = vmatpush1.msra.mxu0 0.0
        %1922 = vmatprep.subr.mxu0 0.0
        %1923 = vmatpush1.msra.mxu0 0.0
        %1924 = vmatprep.subr.mxu0 0.0
        %1925 = vmatpush1.msra.mxu0 0.0
        %1926 = vmatprep.subr.mxu0 0.0
        %1927 = vmatpush1.msra.mxu0 0.0
        %1928 = vmatprep.mubr.f32.mxu0 0.0
        %1929 = vmatmul.mubr.f32.gmra.mrb[0].mxu0 %v1862
        %v1930 = vpop.f32.mrb[0].mxu0
        %v1931 = vadd.f32 %v1859, %v1930
        %v1932 = vpop.f32.mrb[0].mxu0
        %1933 = vdwg.mxu0
        %1934 = vst.msk [vmem:[%s380] sm:$0xff] %vm434, %v1931
        %v1935 = vmul.f32 %v1761, 0.25
        %1936 = vst.msk [vmem:[%s387] sm:$0xff] %vm1178, %v1935
        %s1937 = sand.u32 %s240, 1
        %s1938 = scalar_lea.sflag [#allocation3], %s1937
        %s1939 = sand.u32 %s240, 1
        %s1940 = smul.addr %s1939, 8
        %s1941 = scalar_lea.vmem [#allocation2], %s1940
        %s1942 = sand.u32 %s266, 1
        %s1943 = scalar_lea.sflag [#allocation5], %s1942
        %s1944 = sand.u32 %s266, 1
        %s1945 = smul.addr %s1944, 8
        %s1946 = scalar_lea.vmem [#allocation4], %s1945
        // Predicated region
        $region57: #{tpu_custom_call.1} parent=55 // pred_check
          %p1947 = pneg %p250
        $region58: #{tpu_custom_call.1} parent=55 // pred_check_branch
          %1949 = sbr.rel (%p1947) target = $region60
        $region59: #{tpu_custom_call.1} parent=55 // pred_region
          %s1951 = ssub.s32 128, 128
          %1952 = vsyncadd %s1938, %s1951
          %s1953 = smul.addr %s28, 128
          %s1954 = scalar_lea.hbm %s9, %s1953
          %s1956 = sshll.u32 %s1941, 4
          %s1957 = int_to_ptr.vmem [resolvable:$true] %s1956
          %1959 = dma.vmem_to_hbm [thread:$0]  %s1957, 128, %s1954, %s1938
        $region60: #{tpu_custom_call.1} parent=55 // pred_fallthru
          _
        // Predicated region
        $region61: #{tpu_custom_call.1} parent=55 // pred_check
          %p1960 = pneg %p276
        $region62: #{tpu_custom_call.1} parent=55 // pred_check_branch
          %1962 = sbr.rel (%p1960) target = $region64
        $region63: #{tpu_custom_call.1} parent=55 // pred_region
          %s1964 = ssub.s32 128, 128
          %1965 = vsyncadd %s1943, %s1964
          %s1966 = smul.addr %s28, 128
          %s1967 = scalar_lea.hbm %s10, %s1966
          %s1969 = sshll.u32 %s1946, 4
          %s1970 = int_to_ptr.vmem [resolvable:$true] %s1969
          %1972 = dma.vmem_to_hbm [thread:$0]  %s1970, 128, %s1967, %s1943
        $region64: #{tpu_custom_call.1} parent=55 // pred_fallthru
          _
      $region56: #{tpu_custom_call.1} parent=5 // pred_fallthru
        _
      %p1973 = scmp.le.s32.totalorder 2, %s23
      // Predicated region
      $region65: #{tpu_custom_call.1} parent=5 // pred_check
        %p1974 = pneg %p1973
      $region66: #{tpu_custom_call.1} parent=5 // pred_check_branch
        %1976 = sbr.rel (%p1974) target = $region68
      $region67: #{tpu_custom_call.1} parent=5 // pred_region
        %s1977 = ssub.s32 %s23, 2
        // Predicated region
        $region69: #{tpu_custom_call.1} parent=67 // pred_check
          %p1978 = pneg %p256
        $region70: #{tpu_custom_call.1} parent=67 // pred_check_branch
          %1980 = sbr.rel (%p1978) target = $region72
        $region71: #{tpu_custom_call.1} parent=67 // pred_region
          %s1981 = sand.u32 %s241, 1
          %s1982 = scalar_lea.sflag [#allocation3], %s1981
          %s1983 = sand.u32 %s241, 1
          %s1984 = smul.addr %s1983, 8
          %s1985 = scalar_lea.vmem [#allocation2], %s1984
          %1986 = dma.done %s1982, 128
        $region72: #{tpu_custom_call.1} parent=67 // pred_fallthru
          _
        // Predicated region
        $region73: #{tpu_custom_call.1} parent=67 // pred_check
          %p1987 = pneg %p282
        $region74: #{tpu_custom_call.1} parent=67 // pred_check_branch
          %1989 = sbr.rel (%p1987) target = $region76
        $region75: #{tpu_custom_call.1} parent=67 // pred_region
          %s1990 = sand.u32 %s267, 1
          %s1991 = scalar_lea.sflag [#allocation5], %s1990
          %s1992 = sand.u32 %s267, 1
          %s1993 = smul.addr %s1992, 8
          %s1994 = scalar_lea.vmem [#allocation4], %s1993
          %1995 = dma.done %s1991, 128
        $region76: #{tpu_custom_call.1} parent=67 // pred_fallthru
          _
      $region68: #{tpu_custom_call.1} parent=5 // pred_fallthru
        _
    $region6: #{tpu_custom_call.1} parent=1 // loop_footer
      %s27 = sadd.s32 1, %s23
    $region7: #{tpu_custom_call.1} parent=1 // loop_footer_branch
      %22 = sbr.rel target = $region3
    $region8: #{tpu_custom_call.1} parent=1 // loop_exit
      _
    %1996 = vsyncpa [#allocation3], 1
    %s1997 = scalar_lea.sflag [#allocation3], 1
    %1998 = vsyncpa %s1997, 1
    %1999 = vsyncpa [#allocation5], 1
    %s2000 = scalar_lea.sflag [#allocation5], 1
    %2001 = vsyncpa %s2000, 1

</llo_original>
